<compile_context>
chip_gen: v7x
topology: tpu7x:2x2x1
jax: 0.10.0
libtpu: 0.0.40
codegen_flags: <defaults>
</compile_context>

<pallas_src>
import math

import jax
import jax.numpy as jnp
import numpy as np
from jax import lax
from jax.experimental import pallas as pl
from jax.experimental.pallas import tpu as pltpu

# ---------------- config (small, deterministic) ----------------
B = 2        # batch
T = 8        # sequence length (<= block_size)
C = 32       # n_embd
H = 4        # n_head
HD = C // H  # head dim
EPS = 1e-5
SQRT_HALF = 1.0 / math.sqrt(2.0)


def _norm(v):
    # plain LayerNorm normalization (affine is folded into the next projection)
    mu = jnp.mean(v, axis=-1, keepdims=True)
    var = jnp.mean((v - mu) ** 2, axis=-1, keepdims=True)
    return (v - mu) * lax.rsqrt(var + EPS)


def block_kernel(x_ref,
                 wqkv_ref, bqkv_ref,     # fused QKV projection (ln1 affine folded in)
                 wp_ref, bp_ref,         # output projection, wp pre-reshaped (H, HD, C)
                 w1_ref, b1_ref,         # MLP fc1 (ln2 affine folded in)
                 w2_ref, b2_ref,         # MLP fc2
                 y_ref, attn_ref):
    x3 = x_ref[...]                       # (B, T, C)
    x2 = x3.reshape(B * T, C)             # leading-dim merge only (tile-aligned, free)

    # --- ln1 (normalize only) + fused QKV projection ---
    h1 = _norm(x2)                                                     # (BT, C)
    qkv = jnp.dot(h1, wqkv_ref[...],
                  preferred_element_type=jnp.float32) + bqkv_ref[...]  # (BT, 3C)
    qkv3 = qkv.reshape(B, T, 3 * C)                                    # leading split (free)

    # --- causal mask built in-kernel ---
    row = lax.broadcasted_iota(jnp.int32, (T, T), 0)
    col = lax.broadcasted_iota(jnp.int32, (T, T), 1)
    causal = (col <= row)[None, :, :]                                  # (1, T, T)

    scale = 1.0 / math.sqrt(HD)

    # --- per-head attention, batched over B; output projection accumulated per head ---
    att_heads = []
    y_acc = jnp.zeros((B * T, C), jnp.float32)
    for h in range(H):
        qh = qkv3[:, :, h * HD:(h + 1) * HD]                 # (B, T, HD)
        kh = qkv3[:, :, C + h * HD:C + (h + 1) * HD]         # (B, T, HD)
        vh = qkv3[:, :, 2 * C + h * HD:2 * C + (h + 1) * HD]  # (B, T, HD)

        att = jnp.einsum('bqd,bkd->bqk', qh, kh,
                         preferred_element_type=jnp.float32) * scale   # (B, T, T)
        att = jnp.where(causal, att, -jnp.inf)
        att = jax.nn.softmax(att, axis=-1)                             # pre-dropout attn
        att_heads.append(att)

        yh = jnp.einsum('bqk,bkd->bqd', att, vh,
                        preferred_element_type=jnp.float32)            # (B, T, HD)
        # accumulate the output projection: yh @ Wp[h*HD:(h+1)*HD, :]
        y_acc = y_acc + jnp.dot(yh.reshape(B * T, HD), wp_ref[h],
                                preferred_element_type=jnp.float32)    # (BT, C)

    # single store of all heads' attention weights
    attn_ref[...] = jnp.stack(att_heads, axis=1)                       # (B, H, T, T)

    # --- output projection bias + first residual ---
    x1 = x2 + y_acc + bp_ref[...]                                      # (BT, C)

    # --- ln2 (normalize only) + MLP (exact erf GELU, matching torch nn.GELU default) ---
    h2 = _norm(x1)
    m = jnp.dot(h2, w1_ref[...], preferred_element_type=jnp.float32) + b1_ref[...]
    m = 0.5 * m * (1.0 + lax.erf(m * SQRT_HALF))
    m = jnp.dot(m, w2_ref[...], preferred_element_type=jnp.float32) + b2_ref[...]

    y_ref[...] = (x1 + m).reshape(B, T, C)


@jax.jit
def transformer_block(x, params):
    (ln1w, ln1b, wq, bq, wk, bk, wv, bv, wp, bp,
     ln2w, ln2b, w1, b1, w2, b2) = params

    # ---- one-time wrapper-side weight preprocessing (outside the kernel) ----
    wqkv = jnp.concatenate([wq, wk, wv], axis=1)          # (C, 3C)
    bqkv = jnp.concatenate([bq, bk, bv], axis=1)          # (1, 3C)
    # fold LayerNorm affine into the following projections:
    #   LN(x) @ W + b == norm(x) @ (gamma[:,None]*W) + (beta @ W + b)
    wqkv_f = ln1w.reshape(C, 1) * wqkv
    bqkv_f = ln1b @ wqkv + bqkv
    w1_f = ln2w.reshape(C, 1) * w1
    b1_f = ln2b @ w1 + b1
    wp3 = wp.reshape(H, HD, C)                            # head-major proj weight slices

    vmem = pl.BlockSpec(memory_space=pltpu.MemorySpace.VMEM)

    return pl.pallas_call(
        block_kernel,
        out_shape=(jax.ShapeDtypeStruct((B, T, C), jnp.float32),
                   jax.ShapeDtypeStruct((B, H, T, T), jnp.float32)),
        in_specs=[vmem] * 9,
        out_specs=(vmem, vmem),
    )(x, wqkv_f, bqkv_f, wp3, bp, w1_f, b1_f, w2, b2)


# ---------------- pure-JAX reference (for verification) ----------------
def reference_block(x, params):
    (ln1w, ln1b, wq, bq, wk, bk, wv, bv, wp, bp,
     ln2w, ln2b, w1, b1, w2, b2) = params

    def ln(v, w, b):
        mu = jnp.mean(v, -1, keepdims=True)
        var = jnp.mean((v - mu) ** 2, -1, keepdims=True)
        return (v - mu) / jnp.sqrt(var + EPS) * w + b

    h = ln(x, ln1w, ln1b)
    q = (h @ wq + bq).reshape(B, T, H, HD).transpose(0, 2, 1, 3)
    k = (h @ wk + bk).reshape(B, T, H, HD).transpose(0, 2, 1, 3)
    v = (h @ wv + bv).reshape(B, T, H, HD).transpose(0, 2, 1, 3)
    att = jnp.einsum('bhqd,bhkd->bhqk', q, k) / math.sqrt(HD)
    mask = jnp.tril(jnp.ones((T, T), bool))
    att = jnp.where(mask, att, -jnp.inf)
    att = jax.nn.softmax(att, axis=-1)
    y = jnp.einsum('bhqk,bhkd->bhqd', att, v).transpose(0, 2, 1, 3).reshape(B, T, C)
    y = y @ wp + bp
    x1 = x + y
    h2 = ln(x1, ln2w, ln2b)
    m = h2 @ w1 + b1
    m = 0.5 * m * (1.0 + lax.erf(m * SQRT_HALF))
    m = m @ w2 + b2
    return x1 + m, att


def make_params(key):
    ks = jax.random.split(key, 16)
    f32 = jnp.float32
    std = 0.02
    # non-trivial LN affine + biases so the wrapper-side weight folding is exercised
    ln1w = 1.0 + 0.1 * jax.random.normal(ks[6], (1, C), f32)
    ln1b = 0.1 * jax.random.normal(ks[7], (1, C), f32)
    ln2w = 1.0 + 0.1 * jax.random.normal(ks[8], (1, C), f32)
    ln2b = 0.1 * jax.random.normal(ks[9], (1, C), f32)
    wq = jax.random.normal(ks[0], (C, C), f32) * std
    wk = jax.random.normal(ks[1], (C, C), f32) * std
    wv = jax.random.normal(ks[2], (C, C), f32) * std
    wp = jax.random.normal(ks[3], (C, C), f32) * std
    w1 = jax.random.normal(ks[4], (C, 4 * C), f32) * std
    w2 = jax.random.normal(ks[5], (4 * C, C), f32) * std
    bq = 0.1 * jax.random.normal(ks[10], (1, C), f32)
    bk = 0.1 * jax.random.normal(ks[11], (1, C), f32)
    bv = 0.1 * jax.random.normal(ks[12], (1, C), f32)
    bp = 0.1 * jax.random.normal(ks[13], (1, C), f32)
    b1 = 0.1 * jax.random.normal(ks[14], (1, 4 * C), f32)
    b2 = 0.1 * jax.random.normal(ks[15], (1, C), f32)
    return (ln1w, ln1b, wq, bq, wk, bk, wv, bv, wp, bp,
            ln2w, ln2b, w1, b1, w2, b2)


if __name__ == "__main__":
    key = jax.random.PRNGKey(0)
    kx, kp = jax.random.split(key)
    x = jax.random.normal(kx, (B, T, C), jnp.float32)
    params = make_params(kp)

    y, attn = transformer_block(x, params)
    jax.block_until_ready((y, attn))

    y_ref, attn_ref = reference_block(x, params)
    np.testing.assert_allclose(np.asarray(y), np.asarray(y_ref), rtol=1e-4, atol=1e-4)
    np.testing.assert_allclose(np.asarray(attn), np.asarray(attn_ref), rtol=1e-4, atol=1e-4)

    print("KERNEL_OK")
</pallas_src>

<mosaic_0001>
module attributes {stable_mosaic.version = 11 : i64} {
  func.func @block_kernel(%arg0: memref<2x8x32xf32, #tpu.memory_space<vmem>>, %arg1: memref<32x96xf32, #tpu.memory_space<vmem>>, %arg2: memref<1x96xf32, #tpu.memory_space<vmem>>, %arg3: memref<4x8x32xf32, #tpu.memory_space<vmem>>, %arg4: memref<1x32xf32, #tpu.memory_space<vmem>>, %arg5: memref<32x128xf32, #tpu.memory_space<vmem>>, %arg6: memref<1x128xf32, #tpu.memory_space<vmem>>, %arg7: memref<128x32xf32, #tpu.memory_space<vmem>>, %arg8: memref<1x32xf32, #tpu.memory_space<vmem>>, %arg9: memref<2x8x32xf32, #tpu.memory_space<vmem>>, %arg10: memref<2x4x8x8xf32, #tpu.memory_space<vmem>>) attributes {dimension_semantics = [], scalar_prefetch = 0 : i64, scratch_operands = 0 : i64, tpu.core_type = #tpu.core_type<tc>} {
    %c0 = arith.constant 0 : index
    %c0_0 = arith.constant 0 : index
    %c0_1 = arith.constant 0 : index
    %0 = vector.load %arg0[%c0, %c0_0, %c0_1] : memref<2x8x32xf32, #tpu.memory_space<vmem>>, vector<2x8x32xf32>
    %1 = vector.shape_cast %0 : vector<2x8x32xf32> to vector<16x32xf32>
    %cst = arith.constant dense<0.000000e+00> : vector<16xf32>
    %2 = vector.multi_reduction <add>, %1, %cst [1] : vector<16x32xf32> to vector<16xf32>
    %3 = vector.shape_cast %2 : vector<16xf32> to vector<16x1xf32>
    %cst_2 = arith.constant 3.200000e+01 : f32
    %4 = vector.broadcast %cst_2 : f32 to vector<16x1xf32>
    %5 = arith.divf %3, %4 : vector<16x1xf32>
    %6 = vector.broadcast %5 : vector<16x1xf32> to vector<16x32xf32>
    %7 = arith.subf %1, %6 : vector<16x32xf32>
    %8 = arith.mulf %7, %7 : vector<16x32xf32>
    %cst_3 = arith.constant dense<0.000000e+00> : vector<16xf32>
    %9 = vector.multi_reduction <add>, %8, %cst_3 [1] : vector<16x32xf32> to vector<16xf32>
    %10 = vector.shape_cast %9 : vector<16xf32> to vector<16x1xf32>
    %cst_4 = arith.constant 3.200000e+01 : f32
    %11 = vector.broadcast %cst_4 : f32 to vector<16x1xf32>
    %12 = arith.divf %10, %11 : vector<16x1xf32>
    %13 = vector.broadcast %5 : vector<16x1xf32> to vector<16x32xf32>
    %14 = arith.subf %1, %13 : vector<16x32xf32>
    %cst_5 = arith.constant 9.99999974E-6 : f32
    %15 = vector.broadcast %cst_5 : f32 to vector<16x1xf32>
    %16 = arith.addf %12, %15 : vector<16x1xf32>
    %17 = math.rsqrt %16 : vector<16x1xf32>
    %18 = vector.broadcast %17 : vector<16x1xf32> to vector<16x32xf32>
    %19 = arith.mulf %14, %18 : vector<16x32xf32>
    %c0_6 = arith.constant 0 : index
    %c0_7 = arith.constant 0 : index
    %20 = vector.load %arg1[%c0_6, %c0_7] : memref<32x96xf32, #tpu.memory_space<vmem>>, vector<32x96xf32>
    %cst_8 = arith.constant dense<0.000000e+00> : vector<16x96xf32>
    %21 = tpu.matmul %19, %20, %cst_8 {dimension_numbers = #tpu.dot_dimension_numbers<[1], [0], [0], [1], [0, 0, 1, 1], [], []>} : vector<16x32xf32>, vector<32x96xf32>, vector<16x96xf32> -> vector<16x96xf32>
    %c0_9 = arith.constant 0 : index
    %c0_10 = arith.constant 0 : index
    %22 = vector.load %arg2[%c0_9, %c0_10] : memref<1x96xf32, #tpu.memory_space<vmem>>, vector<1x96xf32>
    %23 = vector.broadcast %22 : vector<1x96xf32> to vector<16x96xf32>
    %24 = arith.addf %21, %23 : vector<16x96xf32>
    %25 = vector.shape_cast %24 : vector<16x96xf32> to vector<2x8x96xf32>
    %26 = tpu.iota {dimensions = array<i32: 0>} : vector<8x8xi32>
    %27 = tpu.iota {dimensions = array<i32: 1>} : vector<8x8xi32>
    %28 = arith.cmpi sle, %27, %26 : vector<8x8xi32>
    %29 = vector.shape_cast %28 : vector<8x8xi1> to vector<1x8x8xi1>
    %cst_11 = arith.constant 0.000000e+00 : f32
    %30 = vector.broadcast %cst_11 : f32 to vector<16x32xf32>
    %31 = vector.extract_strided_slice %25 {offsets = [0, 0, 0], sizes = [2, 8, 8], strides = [1, 1, 1]} : vector<2x8x96xf32> to vector<2x8x8xf32>
    %32 = vector.extract_strided_slice %25 {offsets = [0, 0, 32], sizes = [2, 8, 8], strides = [1, 1, 1]} : vector<2x8x96xf32> to vector<2x8x8xf32>
    %33 = vector.extract_strided_slice %25 {offsets = [0, 0, 64], sizes = [2, 8, 8], strides = [1, 1, 1]} : vector<2x8x96xf32> to vector<2x8x8xf32>
    "tpu.trace_start"() <{level = 10 : i32, message = "bqd,bkd->bqk"}> : () -> ()
    %cst_12 = arith.constant dense<0.000000e+00> : vector<2x8x8xf32>
    %34 = tpu.matmul %31, %32, %cst_12 {dimension_numbers = #tpu.dot_dimension_numbers<[2], [2], [1], [1], [0, 0, 0, 1, 1, 1], [0], [0]>} : vector<2x8x8xf32>, vector<2x8x8xf32>, vector<2x8x8xf32> -> vector<2x8x8xf32>
    "tpu.trace_stop"() : () -> ()
    %cst_13 = arith.constant 0.353553385 : f32
    %35 = vector.broadcast %cst_13 : f32 to vector<2x8x8xf32>
    %36 = arith.mulf %34, %35 : vector<2x8x8xf32>
    %cst_14 = arith.constant 0xFF800000 : f32
    %37 = vector.shape_cast %29 : vector<1x8x8xi1> to vector<1x8x8xi1>
    %38 = vector.broadcast %37 : vector<1x8x8xi1> to vector<2x8x8xi1>
    %39 = vector.broadcast %cst_14 : f32 to vector<2x8x8xf32>
    %40 = arith.select %38, %36, %39 : vector<2x8x8xi1>, vector<2x8x8xf32>
    %cst_15 = arith.constant dense<0xFF800000> : vector<2x8xf32>
    %41 = vector.multi_reduction <maximumf>, %40, %cst_15 [2] : vector<2x8x8xf32> to vector<2x8xf32>
    %cst_16 = arith.constant 0xFF800000 : f32
    %42 = vector.broadcast %cst_16 : f32 to vector<2x8xf32>
    %43 = arith.maximumf %42, %41 : vector<2x8xf32>
    %44 = vector.shape_cast %43 : vector<2x8xf32> to vector<2x8x1xf32>
    %45 = vector.broadcast %44 : vector<2x8x1xf32> to vector<2x8x8xf32>
    %46 = arith.subf %40, %45 : vector<2x8x8xf32>
    %47 = math.exp %46 : vector<2x8x8xf32>
    %cst_17 = arith.constant dense<0.000000e+00> : vector<2x8xf32>
    %48 = vector.multi_reduction <add>, %47, %cst_17 [2] : vector<2x8x8xf32> to vector<2x8xf32>
    %49 = vector.shape_cast %48 : vector<2x8xf32> to vector<2x8x1xf32>
    %50 = vector.broadcast %49 : vector<2x8x1xf32> to vector<2x8x8xf32>
    %51 = arith.divf %47, %50 : vector<2x8x8xf32>
    "tpu.trace_start"() <{level = 10 : i32, message = "bqk,bkd->bqd"}> : () -> ()
    %cst_18 = arith.constant dense<0.000000e+00> : vector<2x8x8xf32>
    %52 = tpu.matmul %51, %33, %cst_18 {dimension_numbers = #tpu.dot_dimension_numbers<[2], [1], [1], [2], [0, 0, 0, 1, 1, 2], [0], [0]>} : vector<2x8x8xf32>, vector<2x8x8xf32>, vector<2x8x8xf32> -> vector<2x8x8xf32>
    "tpu.trace_stop"() : () -> ()
    %53 = vector.shape_cast %52 : vector<2x8x8xf32> to vector<16x8xf32>
    %c0_19 = arith.constant 0 : index
    %c0_20 = arith.constant 0 : index
    %c0_21 = arith.constant 0 : index
    %54 = vector.load %arg3[%c0_19, %c0_20, %c0_21] : memref<4x8x32xf32, #tpu.memory_space<vmem>>, vector<1x8x32xf32>
    %55 = vector.shape_cast %54 : vector<1x8x32xf32> to vector<8x32xf32>
    %cst_22 = arith.constant dense<0.000000e+00> : vector<16x32xf32>
    %56 = tpu.matmul %53, %55, %cst_22 {dimension_numbers = #tpu.dot_dimension_numbers<[1], [0], [0], [1], [0, 0, 1, 1], [], []>} : vector<16x8xf32>, vector<8x32xf32>, vector<16x32xf32> -> vector<16x32xf32>
    %57 = arith.addf %30, %56 : vector<16x32xf32>
    %58 = vector.extract_strided_slice %25 {offsets = [0, 0, 8], sizes = [2, 8, 8], strides = [1, 1, 1]} : vector<2x8x96xf32> to vector<2x8x8xf32>
    %59 = vector.extract_strided_slice %25 {offsets = [0, 0, 40], sizes = [2, 8, 8], strides = [1, 1, 1]} : vector<2x8x96xf32> to vector<2x8x8xf32>
    %60 = vector.extract_strided_slice %25 {offsets = [0, 0, 72], sizes = [2, 8, 8], strides = [1, 1, 1]} : vector<2x8x96xf32> to vector<2x8x8xf32>
    "tpu.trace_start"() <{level = 10 : i32, message = "bqd,bkd->bqk"}> : () -> ()
    %cst_23 = arith.constant dense<0.000000e+00> : vector<2x8x8xf32>
    %61 = tpu.matmul %58, %59, %cst_23 {dimension_numbers = #tpu.dot_dimension_numbers<[2], [2], [1], [1], [0, 0, 0, 1, 1, 1], [0], [0]>} : vector<2x8x8xf32>, vector<2x8x8xf32>, vector<2x8x8xf32> -> vector<2x8x8xf32>
    "tpu.trace_stop"() : () -> ()
    %cst_24 = arith.constant 0.353553385 : f32
    %62 = vector.broadcast %cst_24 : f32 to vector<2x8x8xf32>
    %63 = arith.mulf %61, %62 : vector<2x8x8xf32>
    %cst_25 = arith.constant 0xFF800000 : f32
    %64 = vector.shape_cast %29 : vector<1x8x8xi1> to vector<1x8x8xi1>
    %65 = vector.broadcast %64 : vector<1x8x8xi1> to vector<2x8x8xi1>
    %66 = vector.broadcast %cst_25 : f32 to vector<2x8x8xf32>
    %67 = arith.select %65, %63, %66 : vector<2x8x8xi1>, vector<2x8x8xf32>
    %cst_26 = arith.constant dense<0xFF800000> : vector<2x8xf32>
    %68 = vector.multi_reduction <maximumf>, %67, %cst_26 [2] : vector<2x8x8xf32> to vector<2x8xf32>
    %cst_27 = arith.constant 0xFF800000 : f32
    %69 = vector.broadcast %cst_27 : f32 to vector<2x8xf32>
    %70 = arith.maximumf %69, %68 : vector<2x8xf32>
    %71 = vector.shape_cast %70 : vector<2x8xf32> to vector<2x8x1xf32>
    %72 = vector.broadcast %71 : vector<2x8x1xf32> to vector<2x8x8xf32>
    %73 = arith.subf %67, %72 : vector<2x8x8xf32>
    %74 = math.exp %73 : vector<2x8x8xf32>
    %cst_28 = arith.constant dense<0.000000e+00> : vector<2x8xf32>
    %75 = vector.multi_reduction <add>, %74, %cst_28 [2] : vector<2x8x8xf32> to vector<2x8xf32>
    %76 = vector.shape_cast %75 : vector<2x8xf32> to vector<2x8x1xf32>
    %77 = vector.broadcast %76 : vector<2x8x1xf32> to vector<2x8x8xf32>
    %78 = arith.divf %74, %77 : vector<2x8x8xf32>
    "tpu.trace_start"() <{level = 10 : i32, message = "bqk,bkd->bqd"}> : () -> ()
    %cst_29 = arith.constant dense<0.000000e+00> : vector<2x8x8xf32>
    %79 = tpu.matmul %78, %60, %cst_29 {dimension_numbers = #tpu.dot_dimension_numbers<[2], [1], [1], [2], [0, 0, 0, 1, 1, 2], [0], [0]>} : vector<2x8x8xf32>, vector<2x8x8xf32>, vector<2x8x8xf32> -> vector<2x8x8xf32>
    "tpu.trace_stop"() : () -> ()
    %80 = vector.shape_cast %79 : vector<2x8x8xf32> to vector<16x8xf32>
    %c1 = arith.constant 1 : index
    %c0_30 = arith.constant 0 : index
    %c0_31 = arith.constant 0 : index
    %81 = vector.load %arg3[%c1, %c0_30, %c0_31] : memref<4x8x32xf32, #tpu.memory_space<vmem>>, vector<1x8x32xf32>
    %82 = vector.shape_cast %81 : vector<1x8x32xf32> to vector<8x32xf32>
    %cst_32 = arith.constant dense<0.000000e+00> : vector<16x32xf32>
    %83 = tpu.matmul %80, %82, %cst_32 {dimension_numbers = #tpu.dot_dimension_numbers<[1], [0], [0], [1], [0, 0, 1, 1], [], []>} : vector<16x8xf32>, vector<8x32xf32>, vector<16x32xf32> -> vector<16x32xf32>
    %84 = arith.addf %57, %83 : vector<16x32xf32>
    %85 = vector.extract_strided_slice %25 {offsets = [0, 0, 16], sizes = [2, 8, 8], strides = [1, 1, 1]} : vector<2x8x96xf32> to vector<2x8x8xf32>
    %86 = vector.extract_strided_slice %25 {offsets = [0, 0, 48], sizes = [2, 8, 8], strides = [1, 1, 1]} : vector<2x8x96xf32> to vector<2x8x8xf32>
    %87 = vector.extract_strided_slice %25 {offsets = [0, 0, 80], sizes = [2, 8, 8], strides = [1, 1, 1]} : vector<2x8x96xf32> to vector<2x8x8xf32>
    "tpu.trace_start"() <{level = 10 : i32, message = "bqd,bkd->bqk"}> : () -> ()
    %cst_33 = arith.constant dense<0.000000e+00> : vector<2x8x8xf32>
    %88 = tpu.matmul %85, %86, %cst_33 {dimension_numbers = #tpu.dot_dimension_numbers<[2], [2], [1], [1], [0, 0, 0, 1, 1, 1], [0], [0]>} : vector<2x8x8xf32>, vector<2x8x8xf32>, vector<2x8x8xf32> -> vector<2x8x8xf32>
    "tpu.trace_stop"() : () -> ()
    %cst_34 = arith.constant 0.353553385 : f32
    %89 = vector.broadcast %cst_34 : f32 to vector<2x8x8xf32>
    %90 = arith.mulf %88, %89 : vector<2x8x8xf32>
    %cst_35 = arith.constant 0xFF800000 : f32
    %91 = vector.shape_cast %29 : vector<1x8x8xi1> to vector<1x8x8xi1>
    %92 = vector.broadcast %91 : vector<1x8x8xi1> to vector<2x8x8xi1>
    %93 = vector.broadcast %cst_35 : f32 to vector<2x8x8xf32>
    %94 = arith.select %92, %90, %93 : vector<2x8x8xi1>, vector<2x8x8xf32>
    %cst_36 = arith.constant dense<0xFF800000> : vector<2x8xf32>
    %95 = vector.multi_reduction <maximumf>, %94, %cst_36 [2] : vector<2x8x8xf32> to vector<2x8xf32>
    %cst_37 = arith.constant 0xFF800000 : f32
    %96 = vector.broadcast %cst_37 : f32 to vector<2x8xf32>
    %97 = arith.maximumf %96, %95 : vector<2x8xf32>
    %98 = vector.shape_cast %97 : vector<2x8xf32> to vector<2x8x1xf32>
    %99 = vector.broadcast %98 : vector<2x8x1xf32> to vector<2x8x8xf32>
    %100 = arith.subf %94, %99 : vector<2x8x8xf32>
    %101 = math.exp %100 : vector<2x8x8xf32>
    %cst_38 = arith.constant dense<0.000000e+00> : vector<2x8xf32>
    %102 = vector.multi_reduction <add>, %101, %cst_38 [2] : vector<2x8x8xf32> to vector<2x8xf32>
    %103 = vector.shape_cast %102 : vector<2x8xf32> to vector<2x8x1xf32>
    %104 = vector.broadcast %103 : vector<2x8x1xf32> to vector<2x8x8xf32>
    %105 = arith.divf %101, %104 : vector<2x8x8xf32>
    "tpu.trace_start"() <{level = 10 : i32, message = "bqk,bkd->bqd"}> : () -> ()
    %cst_39 = arith.constant dense<0.000000e+00> : vector<2x8x8xf32>
    %106 = tpu.matmul %105, %87, %cst_39 {dimension_numbers = #tpu.dot_dimension_numbers<[2], [1], [1], [2], [0, 0, 0, 1, 1, 2], [0], [0]>} : vector<2x8x8xf32>, vector<2x8x8xf32>, vector<2x8x8xf32> -> vector<2x8x8xf32>
    "tpu.trace_stop"() : () -> ()
    %107 = vector.shape_cast %106 : vector<2x8x8xf32> to vector<16x8xf32>
    %c2 = arith.constant 2 : index
    %c0_40 = arith.constant 0 : index
    %c0_41 = arith.constant 0 : index
    %108 = vector.load %arg3[%c2, %c0_40, %c0_41] : memref<4x8x32xf32, #tpu.memory_space<vmem>>, vector<1x8x32xf32>
    %109 = vector.shape_cast %108 : vector<1x8x32xf32> to vector<8x32xf32>
    %cst_42 = arith.constant dense<0.000000e+00> : vector<16x32xf32>
    %110 = tpu.matmul %107, %109, %cst_42 {dimension_numbers = #tpu.dot_dimension_numbers<[1], [0], [0], [1], [0, 0, 1, 1], [], []>} : vector<16x8xf32>, vector<8x32xf32>, vector<16x32xf32> -> vector<16x32xf32>
    %111 = arith.addf %84, %110 : vector<16x32xf32>
    %112 = vector.extract_strided_slice %25 {offsets = [0, 0, 24], sizes = [2, 8, 8], strides = [1, 1, 1]} : vector<2x8x96xf32> to vector<2x8x8xf32>
    %113 = vector.extract_strided_slice %25 {offsets = [0, 0, 56], sizes = [2, 8, 8], strides = [1, 1, 1]} : vector<2x8x96xf32> to vector<2x8x8xf32>
    %114 = vector.extract_strided_slice %25 {offsets = [0, 0, 88], sizes = [2, 8, 8], strides = [1, 1, 1]} : vector<2x8x96xf32> to vector<2x8x8xf32>
    "tpu.trace_start"() <{level = 10 : i32, message = "bqd,bkd->bqk"}> : () -> ()
    %cst_43 = arith.constant dense<0.000000e+00> : vector<2x8x8xf32>
    %115 = tpu.matmul %112, %113, %cst_43 {dimension_numbers = #tpu.dot_dimension_numbers<[2], [2], [1], [1], [0, 0, 0, 1, 1, 1], [0], [0]>} : vector<2x8x8xf32>, vector<2x8x8xf32>, vector<2x8x8xf32> -> vector<2x8x8xf32>
    "tpu.trace_stop"() : () -> ()
    %cst_44 = arith.constant 0.353553385 : f32
    %116 = vector.broadcast %cst_44 : f32 to vector<2x8x8xf32>
    %117 = arith.mulf %115, %116 : vector<2x8x8xf32>
    %cst_45 = arith.constant 0xFF800000 : f32
    %118 = vector.shape_cast %29 : vector<1x8x8xi1> to vector<1x8x8xi1>
    %119 = vector.broadcast %118 : vector<1x8x8xi1> to vector<2x8x8xi1>
    %120 = vector.broadcast %cst_45 : f32 to vector<2x8x8xf32>
    %121 = arith.select %119, %117, %120 : vector<2x8x8xi1>, vector<2x8x8xf32>
    %cst_46 = arith.constant dense<0xFF800000> : vector<2x8xf32>
    %122 = vector.multi_reduction <maximumf>, %121, %cst_46 [2] : vector<2x8x8xf32> to vector<2x8xf32>
    %cst_47 = arith.constant 0xFF800000 : f32
    %123 = vector.broadcast %cst_47 : f32 to vector<2x8xf32>
    %124 = arith.maximumf %123, %122 : vector<2x8xf32>
    %125 = vector.shape_cast %124 : vector<2x8xf32> to vector<2x8x1xf32>
    %126 = vector.broadcast %125 : vector<2x8x1xf32> to vector<2x8x8xf32>
    %127 = arith.subf %121, %126 : vector<2x8x8xf32>
    %128 = math.exp %127 : vector<2x8x8xf32>
    %cst_48 = arith.constant dense<0.000000e+00> : vector<2x8xf32>
    %129 = vector.multi_reduction <add>, %128, %cst_48 [2] : vector<2x8x8xf32> to vector<2x8xf32>
    %130 = vector.shape_cast %129 : vector<2x8xf32> to vector<2x8x1xf32>
    %131 = vector.broadcast %130 : vector<2x8x1xf32> to vector<2x8x8xf32>
    %132 = arith.divf %128, %131 : vector<2x8x8xf32>
    "tpu.trace_start"() <{level = 10 : i32, message = "bqk,bkd->bqd"}> : () -> ()
    %cst_49 = arith.constant dense<0.000000e+00> : vector<2x8x8xf32>
    %133 = tpu.matmul %132, %114, %cst_49 {dimension_numbers = #tpu.dot_dimension_numbers<[2], [1], [1], [2], [0, 0, 0, 1, 1, 2], [0], [0]>} : vector<2x8x8xf32>, vector<2x8x8xf32>, vector<2x8x8xf32> -> vector<2x8x8xf32>
    "tpu.trace_stop"() : () -> ()
    %134 = vector.shape_cast %133 : vector<2x8x8xf32> to vector<16x8xf32>
    %c3 = arith.constant 3 : index
    %c0_50 = arith.constant 0 : index
    %c0_51 = arith.constant 0 : index
    %135 = vector.load %arg3[%c3, %c0_50, %c0_51] : memref<4x8x32xf32, #tpu.memory_space<vmem>>, vector<1x8x32xf32>
    %136 = vector.shape_cast %135 : vector<1x8x32xf32> to vector<8x32xf32>
    %cst_52 = arith.constant dense<0.000000e+00> : vector<16x32xf32>
    %137 = tpu.matmul %134, %136, %cst_52 {dimension_numbers = #tpu.dot_dimension_numbers<[1], [0], [0], [1], [0, 0, 1, 1], [], []>} : vector<16x8xf32>, vector<8x32xf32>, vector<16x32xf32> -> vector<16x32xf32>
    %138 = arith.addf %111, %137 : vector<16x32xf32>
    %139 = vector.shape_cast %51 : vector<2x8x8xf32> to vector<2x1x8x8xf32>
    %140 = vector.shape_cast %78 : vector<2x8x8xf32> to vector<2x1x8x8xf32>
    %141 = vector.shape_cast %105 : vector<2x8x8xf32> to vector<2x1x8x8xf32>
    %142 = vector.shape_cast %132 : vector<2x8x8xf32> to vector<2x1x8x8xf32>
    %143 = tpu.concatenate %139, %140, %141, %142 in 1 : vector<2x1x8x8xf32>, vector<2x1x8x8xf32>, vector<2x1x8x8xf32>, vector<2x1x8x8xf32> -> vector<2x4x8x8xf32>
    %c0_53 = arith.constant 0 : index
    %c0_54 = arith.constant 0 : index
    %c0_55 = arith.constant 0 : index
    %c0_56 = arith.constant 0 : index
    %144 = vector.load %arg10[%c0_53, %c0_54, %c0_55, %c0_56] : memref<2x4x8x8xf32, #tpu.memory_space<vmem>>, vector<2x4x8x8xf32>
    tpu.vector_store %arg10[%c0_53, %c0_54, %c0_55, %c0_56], %143 {strides = array<i32>} : memref<2x4x8x8xf32, #tpu.memory_space<vmem>>, vector<2x4x8x8xf32>,
    %145 = arith.addf %1, %138 : vector<16x32xf32>
    %c0_57 = arith.constant 0 : index
    %c0_58 = arith.constant 0 : index
    %146 = vector.load %arg4[%c0_57, %c0_58] : memref<1x32xf32, #tpu.memory_space<vmem>>, vector<1x32xf32>
    %147 = vector.broadcast %146 : vector<1x32xf32> to vector<16x32xf32>
    %148 = arith.addf %145, %147 : vector<16x32xf32>
    %cst_59 = arith.constant dense<0.000000e+00> : vector<16xf32>
    %149 = vector.multi_reduction <add>, %148, %cst_59 [1] : vector<16x32xf32> to vector<16xf32>
    %150 = vector.shape_cast %149 : vector<16xf32> to vector<16x1xf32>
    %cst_60 = arith.constant 3.200000e+01 : f32
    %151 = vector.broadcast %cst_60 : f32 to vector<16x1xf32>
    %152 = arith.divf %150, %151 : vector<16x1xf32>
    %153 = vector.broadcast %152 : vector<16x1xf32> to vector<16x32xf32>
    %154 = arith.subf %148, %153 : vector<16x32xf32>
    %155 = arith.mulf %154, %154 : vector<16x32xf32>
    %cst_61 = arith.constant dense<0.000000e+00> : vector<16xf32>
    %156 = vector.multi_reduction <add>, %155, %cst_61 [1] : vector<16x32xf32> to vector<16xf32>
    %157 = vector.shape_cast %156 : vector<16xf32> to vector<16x1xf32>
    %cst_62 = arith.constant 3.200000e+01 : f32
    %158 = vector.broadcast %cst_62 : f32 to vector<16x1xf32>
    %159 = arith.divf %157, %158 : vector<16x1xf32>
    %160 = vector.broadcast %152 : vector<16x1xf32> to vector<16x32xf32>
    %161 = arith.subf %148, %160 : vector<16x32xf32>
    %cst_63 = arith.constant 9.99999974E-6 : f32
    %162 = vector.broadcast %cst_63 : f32 to vector<16x1xf32>
    %163 = arith.addf %159, %162 : vector<16x1xf32>
    %164 = math.rsqrt %163 : vector<16x1xf32>
    %165 = vector.broadcast %164 : vector<16x1xf32> to vector<16x32xf32>
    %166 = arith.mulf %161, %165 : vector<16x32xf32>
    %c0_64 = arith.constant 0 : index
    %c0_65 = arith.constant 0 : index
    %167 = vector.load %arg5[%c0_64, %c0_65] : memref<32x128xf32, #tpu.memory_space<vmem>>, vector<32x128xf32>
    %cst_66 = arith.constant dense<0.000000e+00> : vector<16x128xf32>
    %168 = tpu.matmul %166, %167, %cst_66 {dimension_numbers = #tpu.dot_dimension_numbers<[1], [0], [0], [1], [0, 0, 1, 1], [], []>} : vector<16x32xf32>, vector<32x128xf32>, vector<16x128xf32> -> vector<16x128xf32>
    %c0_67 = arith.constant 0 : index
    %c0_68 = arith.constant 0 : index
    %169 = vector.load %arg6[%c0_67, %c0_68] : memref<1x128xf32, #tpu.memory_space<vmem>>, vector<1x128xf32>
    %170 = vector.broadcast %169 : vector<1x128xf32> to vector<16x128xf32>
    %171 = arith.addf %168, %170 : vector<16x128xf32>
    %cst_69 = arith.constant 5.000000e-01 : f32
    %172 = vector.broadcast %cst_69 : f32 to vector<16x128xf32>
    %173 = arith.mulf %172, %171 : vector<16x128xf32>
    %cst_70 = arith.constant 0.707106769 : f32
    %174 = vector.broadcast %cst_70 : f32 to vector<16x128xf32>
    %175 = arith.mulf %171, %174 : vector<16x128xf32>
    %176 = math.erf %175 : vector<16x128xf32>
    %cst_71 = arith.constant 1.000000e+00 : f32
    %177 = vector.broadcast %cst_71 : f32 to vector<16x128xf32>
    %178 = arith.addf %177, %176 : vector<16x128xf32>
    %179 = arith.mulf %173, %178 : vector<16x128xf32>
    %c0_72 = arith.constant 0 : index
    %c0_73 = arith.constant 0 : index
    %180 = vector.load %arg7[%c0_72, %c0_73] : memref<128x32xf32, #tpu.memory_space<vmem>>, vector<128x32xf32>
    %cst_74 = arith.constant dense<0.000000e+00> : vector<16x32xf32>
    %181 = tpu.matmul %179, %180, %cst_74 {dimension_numbers = #tpu.dot_dimension_numbers<[1], [0], [0], [1], [0, 0, 1, 1], [], []>} : vector<16x128xf32>, vector<128x32xf32>, vector<16x32xf32> -> vector<16x32xf32>
    %c0_75 = arith.constant 0 : index
    %c0_76 = arith.constant 0 : index
    %182 = vector.load %arg8[%c0_75, %c0_76] : memref<1x32xf32, #tpu.memory_space<vmem>>, vector<1x32xf32>
    %183 = vector.broadcast %182 : vector<1x32xf32> to vector<16x32xf32>
    %184 = arith.addf %181, %183 : vector<16x32xf32>
    %185 = arith.addf %148, %184 : vector<16x32xf32>
    %186 = vector.shape_cast %185 : vector<16x32xf32> to vector<2x8x32xf32>
    %c0_77 = arith.constant 0 : index
    %c0_78 = arith.constant 0 : index
    %c0_79 = arith.constant 0 : index
    %187 = vector.load %arg9[%c0_77, %c0_78, %c0_79] : memref<2x8x32xf32, #tpu.memory_space<vmem>>, vector<2x8x32xf32>
    tpu.vector_store %arg9[%c0_77, %c0_78, %c0_79], %186 {strides = array<i32>} : memref<2x8x32xf32, #tpu.memory_space<vmem>>, vector<2x8x32xf32>,
    return
  }
}

</mosaic_0001>

<llo_original>
// kernel: transformer_block.1
$region0: #{transformer_block.1}
  #allocation0 [shape = 'u32[]', space=smem, size = 0x4, offset = 0x4, fixed_abs, tag = 'smem constant byte address 0x4 - core index']
  #allocation1 [shape = 'u32[144,128]{1,0:T(1,128)}', space=vmem, size = 0x12000, scoped, tag = 'internal scratch']
  %s0 = inlined_call_operand.vmem [shape: f32[2,8,32], index: 0, kind: input, shape index: {}]
  %s1 = inlined_call_operand.vmem [shape: f32[32,96], index: 1, kind: input, shape index: {}]
  %s2 = inlined_call_operand.vmem [shape: f32[1,96], index: 2, kind: input, shape index: {}]
  %s3 = inlined_call_operand.vmem [shape: f32[4,8,32], index: 3, kind: input, shape index: {}]
  %s4 = inlined_call_operand.vmem [shape: f32[1,32], index: 4, kind: input, shape index: {}]
  %s5 = inlined_call_operand.vmem [shape: f32[32,128], index: 5, kind: input, shape index: {}]
  %s6 = inlined_call_operand.vmem [shape: f32[1,128], index: 6, kind: input, shape index: {}]
  %s7 = inlined_call_operand.vmem [shape: f32[128,32], index: 7, kind: input, shape index: {}]
  %s8 = inlined_call_operand.vmem [shape: f32[1,32], index: 8, kind: input, shape index: {}]
  %s9 = inlined_call_operand.hbm [shape: f32[2,8,32], index: 9, kind: output, shape index: {0}]
  %s10 = inlined_call_operand.hbm [shape: f32[2,4,8,8], index: 10, kind: output, shape index: {1}]
  %11 = xla_tuple %s9, %s10
  %s12 = sld [smem:[#allocation0]]
  $region54: #{transformer_block.1} parent=0
    _
  %s14 = ssub.s32 1, %s12
  %s15 = scalar_select 0, %s14, %s12
  $region1: #{transformer_block.1} parent=0
    #allocation2 [shape = 'u8[8192]{0}', space=vmem, size = 0x2000, scoped, tag = 'output window, operand 0, single buffered']
    #allocation3 [shape = 's32[1]{0}', space=sflag, size = 0x4, scoped, tag = 'scoped memory for transformer_block.1']
    #allocation4 [shape = 'u8[32768]{0}', space=vmem, size = 0x8000, scoped, tag = 'output window, operand 1, single buffered']
    #allocation5 [shape = 's32[1]{0}', space=sflag, size = 0x4, scoped, tag = 'scoped memory for transformer_block.1']
    %16 = vsyncpa [#allocation3], 0
    %17 = vsyncpa [#allocation5], 0
    // Predicated region
    $region2: #{transformer_block.1} parent=1 // pred_check
      _
    $region3: #{transformer_block.1} parent=1 // pred_check_branch
      %19 = sbr.rel (0) target = $region5
    $region4: #{transformer_block.1} parent=1 // pred_region
      _
    $region5: #{transformer_block.1} parent=1 // pred_fallthru
      _
    // Predicated region
    $region6: #{transformer_block.1} parent=1 // pred_check
      _
    $region7: #{transformer_block.1} parent=1 // pred_check_branch
      %21 = sbr.rel (0) target = $region9
    $region8: #{transformer_block.1} parent=1 // pred_region
      _
    $region9: #{transformer_block.1} parent=1 // pred_fallthru
      _
    // Predicated region
    $region10: #{transformer_block.1} parent=1 // pred_check
      _
    $region11: #{transformer_block.1} parent=1 // pred_check_branch
      %23 = sbr.rel (0) target = $region13
    $region12: #{transformer_block.1} parent=1 // pred_region
      _
    $region13: #{transformer_block.1} parent=1 // pred_fallthru
      _
    // Predicated region
    $region14: #{transformer_block.1} parent=1 // pred_check
      _
    $region15: #{transformer_block.1} parent=1 // pred_check_branch
      %25 = sbr.rel (0) target = $region17
    $region16: #{transformer_block.1} parent=1 // pred_region
      _
    $region17: #{transformer_block.1} parent=1 // pred_fallthru
      _
    // Predicated region
    $region18: #{transformer_block.1} parent=1 // pred_check
      _
    $region19: #{transformer_block.1} parent=1 // pred_check_branch
      %27 = sbr.rel (0) target = $region21
    $region20: #{transformer_block.1} parent=1 // pred_region
      _
    $region21: #{transformer_block.1} parent=1 // pred_fallthru
      _
    // Predicated region
    $region22: #{transformer_block.1} parent=1 // pred_check
      _
    $region23: #{transformer_block.1} parent=1 // pred_check_branch
      %29 = sbr.rel (0) target = $region25
    $region24: #{transformer_block.1} parent=1 // pred_region
      _
    $region25: #{transformer_block.1} parent=1 // pred_fallthru
      _
    // Predicated region
    $region26: #{transformer_block.1} parent=1 // pred_check
      _
    $region27: #{transformer_block.1} parent=1 // pred_check_branch
      %31 = sbr.rel (0) target = $region29
    $region28: #{transformer_block.1} parent=1 // pred_region
      _
    $region29: #{transformer_block.1} parent=1 // pred_fallthru
      _
    // Predicated region
    $region30: #{transformer_block.1} parent=1 // pred_check
      _
    $region31: #{transformer_block.1} parent=1 // pred_check_branch
      %33 = sbr.rel (0) target = $region33
    $region32: #{transformer_block.1} parent=1 // pred_region
      _
    $region33: #{transformer_block.1} parent=1 // pred_fallthru
      _
    // Predicated region
    $region34: #{transformer_block.1} parent=1 // pred_check
      _
    $region35: #{transformer_block.1} parent=1 // pred_check_branch
      %35 = sbr.rel (0) target = $region37
    $region36: #{transformer_block.1} parent=1 // pred_region
      _
    $region37: #{transformer_block.1} parent=1 // pred_fallthru
      _
    %v36 = vld [vmem:[%s0] sm:$0xff]
    %v37 = vld [vmem:[%s0 + $0x8] sm:$0xff]
    %vm38 = vcmask 261120
    %v39 = vsel %vm38, %v36, 0.0
    %40 = vadd.xlane.f32.xlu0 %v39
    %v41 = vpop.xlane.xlu0 %40
    %v42 = vsel %vm38, %v37, 0.0
    %43 = vadd.xlane.f32.xlu0 %v42
    %v44 = vpop.xlane.xlu0 %43
    %v45 = vrcp.pop 32.0
    %v46 = vmul.f32 %v41, %v45
    %v47 = vmul.f32 %v44, %v45
    %v48 = vsub.f32 %v36, %v46
    %v49 = vsub.f32 %v37, %v47
    %v50 = vmul.f32 %v48, %v48
    %v51 = vmul.f32 %v49, %v49
    %v52 = vsel %vm38, %v50, 0.0
    %53 = vadd.xlane.f32.xlu0 %v52
    %v54 = vpop.xlane.xlu0 %53
    %v55 = vsel %vm38, %v51, 0.0
    %56 = vadd.xlane.f32.xlu0 %v55
    %v57 = vpop.xlane.xlu0 %56
    %v58 = vmul.f32 %v54, %v45
    %v59 = vmul.f32 %v57, %v45
    %v60 = vadd.f32 %v58, 1e-05
    %v61 = vadd.f32 %v59, 1e-05
    %v62 = vrsqrt.pop %v60
    %v63 = vrsqrt.pop %v61
    %v64 = vmul.f32 %v48, %v62
    %v65 = vmul.f32 %v49, %v63
    %v66 = vld [vmem:[%s1] sm:$0xff]
    %v67 = vld [vmem:[%s1 + $0x8] sm:$0xff]
    %v68 = vld [vmem:[%s1 + $0x10] sm:$0xff]
    %v69 = vld [vmem:[%s1 + $0x18] sm:$0xff]
    %v70 = vld [vmem:[%s2] sm:$0x1]
    %v72 = vlaneseq
    %v73 = vshrl.u32 %v72, 7
    %v74 = vsub.s32 0, %v73
    %v75 = vrot.slane %v70, %v74
    %v78 = vsel %vm38, %v64, 0
    %v81 = vsel %vm38, %v65, 0
    %83 = vmatprep.subr.mxu0 0.0
    %84 = vmatpush1.msra.mxu0 %v66
    %85 = vmatprep.subr.mxu0 0.0
    %86 = vmatpush1.msra.mxu0 %v67
    %87 = vmatprep.subr.mxu0 0.0
    %88 = vmatpush1.msra.mxu0 %v68
    %89 = vmatprep.subr.mxu0 0.0
    %90 = vmatpush1.msra.mxu0 %v69
    %91 = vmatprep.subr.mxu0 0.0
    %92 = vmatpush1.msra.mxu0 0.0
    %93 = vmatprep.subr.mxu0 0.0
    %94 = vmatpush1.msra.mxu0 0.0
    %95 = vmatprep.subr.mxu0 0.0
    %96 = vmatpush1.msra.mxu0 0.0
    %97 = vmatprep.subr.mxu0 0.0
    %98 = vmatpush1.msra.mxu0 0.0
    %99 = vmatprep.subr.mxu0 0.0
    %100 = vmatpush1.msra.mxu0 0.0
    %101 = vmatprep.subr.mxu0 0.0
    %102 = vmatpush1.msra.mxu0 0.0
    %103 = vmatprep.subr.mxu0 0.0
    %104 = vmatpush1.msra.mxu0 0.0
    %105 = vmatprep.subr.mxu0 0.0
    %106 = vmatpush1.msra.mxu0 0.0
    %107 = vmatprep.subr.mxu0 0.0
    %108 = vmatpush1.msra.mxu0 0.0
    %109 = vmatprep.subr.mxu0 0.0
    %110 = vmatpush1.msra.mxu0 0.0
    %111 = vmatprep.subr.mxu0 0.0
    %112 = vmatpush1.msra.mxu0 0.0
    %113 = vmatprep.subr.mxu0 0.0
    %114 = vmatpush1.msra.mxu0 0.0
    %115 = vmatprep.subr.mxu0 0.0
    %116 = vmatpush1.msra.mxu0 0.0
    %117 = vmatprep.subr.mxu0 0.0
    %118 = vmatpush1.msra.mxu0 0.0
    %119 = vmatprep.subr.mxu0 0.0
    %120 = vmatpush1.msra.mxu0 0.0
    %121 = vmatprep.subr.mxu0 0.0
    %122 = vmatpush1.msra.mxu0 0.0
    %123 = vmatprep.subr.mxu0 0.0
    %124 = vmatpush1.msra.mxu0 0.0
    %125 = vmatprep.subr.mxu0 0.0
    %126 = vmatpush1.msra.mxu0 0.0
    %127 = vmatprep.subr.mxu0 0.0
    %128 = vmatpush1.msra.mxu0 0.0
    %129 = vmatprep.subr.mxu0 0.0
    %130 = vmatpush1.msra.mxu0 0.0
    %131 = vmatprep.subr.mxu0 0.0
    %132 = vmatpush1.msra.mxu0 0.0
    %133 = vmatprep.subr.mxu0 0.0
    %134 = vmatpush1.msra.mxu0 0.0
    %135 = vmatprep.subr.mxu0 0.0
    %136 = vmatpush1.msra.mxu0 0.0
    %137 = vmatprep.subr.mxu0 0.0
    %138 = vmatpush1.msra.mxu0 0.0
    %139 = vmatprep.subr.mxu0 0.0
    %140 = vmatpush1.msra.mxu0 0.0
    %141 = vmatprep.subr.mxu0 0.0
    %142 = vmatpush1.msra.mxu0 0.0
    %143 = vmatprep.subr.mxu0 0.0
    %144 = vmatpush1.msra.mxu0 0.0
    %145 = vmatprep.subr.mxu0 0.0
    %146 = vmatpush1.msra.mxu0 0.0
    %147 = vmatprep.mubr.f32.mxu0 0.0
    %148 = vmatmul.mubr.f32.gmra.mrb[0].mxu0 %v78
    %v149 = vpop.f32.mrb[0].mxu0
    %v150 = vadd.f32 %v75, %v149
    %v151 = vpop.f32.mrb[0].mxu0
    %152 = vmatprep.mubr.f32.mxu0 0.0
    %153 = vmatmul.mubr.f32.gmra.mrb[0].mxu0 %v81
    %v154 = vpop.f32.mrb[0].mxu0
    %v155 = vadd.f32 %v75, %v154
    %v156 = vpop.f32.mrb[0].mxu0
    %157 = vdwg.mxu0
    %v158 = vlaneseq
    %v159 = vshrl.u32 %v158, 7
    %v160 = vlaneseq
    %v161 = vand.u32 %v160, 127
    %vm162 = vcmp.le.s32.totalorder %v161, %v159
    %164 = vrot.lane.b32.xlu0 %v150, 96
    %v165 = vpop.permute.xlu0 %164
    %vm166 = vcmask 64512
    %v167 = vsel %vm166, %v150, 0
    %v169 = vsel %vm166, %v165, 0
    %171 = vmatprep.subr.mxu0 0.0
    %172 = vmatpush1.xpose.msra.mxu0 %v169
    %173 = vmatprep.subr.mxu0 0.0
    %174 = vmatpush1.xpose.msra.mxu0 0.0
    %175 = vmatprep.subr.mxu0 0.0
    %176 = vmatpush1.xpose.msra.mxu0 0.0
    %177 = vmatprep.subr.mxu0 0.0
    %178 = vmatpush1.xpose.msra.mxu0 0.0
    %179 = vmatprep.subr.mxu0 0.0
    %180 = vmatpush1.xpose.msra.mxu0 0.0
    %181 = vmatprep.subr.mxu0 0.0
    %182 = vmatpush1.xpose.msra.mxu0 0.0
    %183 = vmatprep.subr.mxu0 0.0
    %184 = vmatpush1.xpose.msra.mxu0 0.0
    %185 = vmatprep.subr.mxu0 0.0
    %186 = vmatpush1.xpose.msra.mxu0 0.0
    %187 = vmatprep.subr.mxu0 0.0
    %188 = vmatpush1.xpose.msra.mxu0 0.0
    %189 = vmatprep.subr.mxu0 0.0
    %190 = vmatpush1.xpose.msra.mxu0 0.0
    %191 = vmatprep.subr.mxu0 0.0
    %192 = vmatpush1.xpose.msra.mxu0 0.0
    %193 = vmatprep.subr.mxu0 0.0
    %194 = vmatpush1.xpose.msra.mxu0 0.0
    %195 = vmatprep.subr.mxu0 0.0
    %196 = vmatpush1.xpose.msra.mxu0 0.0
    %197 = vmatprep.subr.mxu0 0.0
    %198 = vmatpush1.xpose.msra.mxu0 0.0
    %199 = vmatprep.subr.mxu0 0.0
    %200 = vmatpush1.xpose.msra.mxu0 0.0
    %201 = vmatprep.subr.mxu0 0.0
    %202 = vmatpush1.xpose.msra.mxu0 0.0
    %203 = vmatprep.subr.mxu0 0.0
    %204 = vmatpush1.xpose.msra.mxu0 0.0
    %205 = vmatprep.subr.mxu0 0.0
    %206 = vmatpush1.xpose.msra.mxu0 0.0
    %207 = vmatprep.subr.mxu0 0.0
    %208 = vmatpush1.xpose.msra.mxu0 0.0
    %209 = vmatprep.subr.mxu0 0.0
    %210 = vmatpush1.xpose.msra.mxu0 0.0
    %211 = vmatprep.subr.mxu0 0.0
    %212 = vmatpush1.xpose.msra.mxu0 0.0
    %213 = vmatprep.subr.mxu0 0.0
    %214 = vmatpush1.xpose.msra.mxu0 0.0
    %215 = vmatprep.subr.mxu0 0.0
    %216 = vmatpush1.xpose.msra.mxu0 0.0
    %217 = vmatprep.subr.mxu0 0.0
    %218 = vmatpush1.xpose.msra.mxu0 0.0
    %219 = vmatprep.subr.mxu0 0.0
    %220 = vmatpush1.xpose.msra.mxu0 0.0
    %221 = vmatprep.subr.mxu0 0.0
    %222 = vmatpush1.xpose.msra.mxu0 0.0
    %223 = vmatprep.subr.mxu0 0.0
    %224 = vmatpush1.xpose.msra.mxu0 0.0
    %225 = vmatprep.subr.mxu0 0.0
    %226 = vmatpush1.xpose.msra.mxu0 0.0
    %227 = vmatprep.subr.mxu0 0.0
    %228 = vmatpush1.xpose.msra.mxu0 0.0
    %229 = vmatprep.subr.mxu0 0.0
    %230 = vmatpush1.xpose.msra.mxu0 0.0
    %231 = vmatprep.subr.mxu0 0.0
    %232 = vmatpush1.xpose.msra.mxu0 0.0
    %233 = vmatprep.subr.mxu0 0.0
    %234 = vmatpush1.xpose.msra.mxu0 0.0
    %235 = vmatprep.mubr.f32.mxu0 0.0
    %236 = vmatmul.mubr.f32.gmra.mrb[0].mxu0 %v167
    %v237 = vpop.f32.mrb[0].mxu0
    %v238 = vadd.f32 0.0, %v237
    %v239 = vpop.f32.mrb[0].mxu0
    %240 = vdwg.mxu0
    %242 = vrot.lane.b32.xlu0 %v155, 96
    %v243 = vpop.permute.xlu0 %242
    %v244 = vsel %vm166, %v155, 0
    %v246 = vsel %vm166, %v243, 0
    %248 = vmatprep.subr.mxu0 0.0
    %249 = vmatpush1.xpose.msra.mxu0 %v246
    %250 = vmatprep.subr.mxu0 0.0
    %251 = vmatpush1.xpose.msra.mxu0 0.0
    %252 = vmatprep.subr.mxu0 0.0
    %253 = vmatpush1.xpose.msra.mxu0 0.0
    %254 = vmatprep.subr.mxu0 0.0
    %255 = vmatpush1.xpose.msra.mxu0 0.0
    %256 = vmatprep.subr.mxu0 0.0
    %257 = vmatpush1.xpose.msra.mxu0 0.0
    %258 = vmatprep.subr.mxu0 0.0
    %259 = vmatpush1.xpose.msra.mxu0 0.0
    %260 = vmatprep.subr.mxu0 0.0
    %261 = vmatpush1.xpose.msra.mxu0 0.0
    %262 = vmatprep.subr.mxu0 0.0
    %263 = vmatpush1.xpose.msra.mxu0 0.0
    %264 = vmatprep.subr.mxu0 0.0
    %265 = vmatpush1.xpose.msra.mxu0 0.0
    %266 = vmatprep.subr.mxu0 0.0
    %267 = vmatpush1.xpose.msra.mxu0 0.0
    %268 = vmatprep.subr.mxu0 0.0
    %269 = vmatpush1.xpose.msra.mxu0 0.0
    %270 = vmatprep.subr.mxu0 0.0
    %271 = vmatpush1.xpose.msra.mxu0 0.0
    %272 = vmatprep.subr.mxu0 0.0
    %273 = vmatpush1.xpose.msra.mxu0 0.0
    %274 = vmatprep.subr.mxu0 0.0
    %275 = vmatpush1.xpose.msra.mxu0 0.0
    %276 = vmatprep.subr.mxu0 0.0
    %277 = vmatpush1.xpose.msra.mxu0 0.0
    %278 = vmatprep.subr.mxu0 0.0
    %279 = vmatpush1.xpose.msra.mxu0 0.0
    %280 = vmatprep.subr.mxu0 0.0
    %281 = vmatpush1.xpose.msra.mxu0 0.0
    %282 = vmatprep.subr.mxu0 0.0
    %283 = vmatpush1.xpose.msra.mxu0 0.0
    %284 = vmatprep.subr.mxu0 0.0
    %285 = vmatpush1.xpose.msra.mxu0 0.0
    %286 = vmatprep.subr.mxu0 0.0
    %287 = vmatpush1.xpose.msra.mxu0 0.0
    %288 = vmatprep.subr.mxu0 0.0
    %289 = vmatpush1.xpose.msra.mxu0 0.0
    %290 = vmatprep.subr.mxu0 0.0
    %291 = vmatpush1.xpose.msra.mxu0 0.0
    %292 = vmatprep.subr.mxu0 0.0
    %293 = vmatpush1.xpose.msra.mxu0 0.0
    %294 = vmatprep.subr.mxu0 0.0
    %295 = vmatpush1.xpose.msra.mxu0 0.0
    %296 = vmatprep.subr.mxu0 0.0
    %297 = vmatpush1.xpose.msra.mxu0 0.0
    %298 = vmatprep.subr.mxu0 0.0
    %299 = vmatpush1.xpose.msra.mxu0 0.0
    %300 = vmatprep.subr.mxu0 0.0
    %301 = vmatpush1.xpose.msra.mxu0 0.0
    %302 = vmatprep.subr.mxu0 0.0
    %303 = vmatpush1.xpose.msra.mxu0 0.0
    %304 = vmatprep.subr.mxu0 0.0
    %305 = vmatpush1.xpose.msra.mxu0 0.0
    %306 = vmatprep.subr.mxu0 0.0
    %307 = vmatpush1.xpose.msra.mxu0 0.0
    %308 = vmatprep.subr.mxu0 0.0
    %309 = vmatpush1.xpose.msra.mxu0 0.0
    %310 = vmatprep.subr.mxu0 0.0
    %311 = vmatpush1.xpose.msra.mxu0 0.0
    %312 = vmatprep.mubr.f32.mxu0 0.0
    %313 = vmatmul.mubr.f32.gmra.mrb[0].mxu0 %v244
    %v314 = vpop.f32.mrb[0].mxu0
    %v315 = vadd.f32 0.0, %v314
    %v316 = vpop.f32.mrb[0].mxu0
    %317 = vdwg.mxu0
    %v318 = vmul.f32 %v238, 0.35355338
    %v319 = vmul.f32 %v315, 0.35355338
    %v320 = vsel %vm162, 1, 0
    %vm321 = vcmp.eq.s32.totalorder %v320, 1
    %v322 = vsel %vm321, %v318, -inf
    %v323 = vsel %vm321, %v319, -inf
    %v324 = vsel %vm166, %v322, -inf
    %325 = vmax.xlane.f32.xlu0 %v324
    %v326 = vpop.xlane.xlu0 %325
    %v327 = vsel %vm166, %v323, -inf
    %328 = vmax.xlane.f32.xlu0 %v327
    %v329 = vpop.xlane.xlu0 %328
    %v330 = vsub.f32 %v322, %v326
    %v331 = vsub.f32 %v323, %v329
    %v332 = vmul.f32 %v330, 1.442695
    %v333 = vpow.pop %v332
    %v334 = vmul.f32 %v331, 1.442695
    %v335 = vpow.pop %v334
    %v336 = vsel %vm166, %v333, 0.0
    %337 = vadd.xlane.f32.xlu0 %v336
    %v338 = vpop.xlane.xlu0 %337
    %v339 = vsel %vm166, %v335, 0.0
    %340 = vadd.xlane.f32.xlu0 %v339
    %v341 = vpop.xlane.xlu0 %340
    %v342 = vrcp.pop %v338
    %v343 = vmul.f32 %v333, %v342
    %v344 = vrcp.pop %v341
    %v345 = vmul.f32 %v335, %v344
    %346 = vrot.lane.b32.xlu0 %v150, 64
    %v347 = vpop.permute.xlu0 %346
    %v350 = vsel %vm166, %v343, 0
    %352 = vmatprep.subr.mxu0 0.0
    %353 = vmatpush1.msra.mxu0 %v347
    %354 = vmatprep.subr.mxu0 0.0
    %355 = vmatpush1.msra.mxu0 0.0
    %356 = vmatprep.subr.mxu0 0.0
    %357 = vmatpush1.msra.mxu0 0.0
    %358 = vmatprep.subr.mxu0 0.0
    %359 = vmatpush1.msra.mxu0 0.0
    %360 = vmatprep.subr.mxu0 0.0
    %361 = vmatpush1.msra.mxu0 0.0
    %362 = vmatprep.subr.mxu0 0.0
    %363 = vmatpush1.msra.mxu0 0.0
    %364 = vmatprep.subr.mxu0 0.0
    %365 = vmatpush1.msra.mxu0 0.0
    %366 = vmatprep.subr.mxu0 0.0
    %367 = vmatpush1.msra.mxu0 0.0
    %368 = vmatprep.subr.mxu0 0.0
    %369 = vmatpush1.msra.mxu0 0.0
    %370 = vmatprep.subr.mxu0 0.0
    %371 = vmatpush1.msra.mxu0 0.0
    %372 = vmatprep.subr.mxu0 0.0
    %373 = vmatpush1.msra.mxu0 0.0
    %374 = vmatprep.subr.mxu0 0.0
    %375 = vmatpush1.msra.mxu0 0.0
    %376 = vmatprep.subr.mxu0 0.0
    %377 = vmatpush1.msra.mxu0 0.0
    %378 = vmatprep.subr.mxu0 0.0
    %379 = vmatpush1.msra.mxu0 0.0
    %380 = vmatprep.subr.mxu0 0.0
    %381 = vmatpush1.msra.mxu0 0.0
    %382 = vmatprep.subr.mxu0 0.0
    %383 = vmatpush1.msra.mxu0 0.0
    %384 = vmatprep.subr.mxu0 0.0
    %385 = vmatpush1.msra.mxu0 0.0
    %386 = vmatprep.subr.mxu0 0.0
    %387 = vmatpush1.msra.mxu0 0.0
    %388 = vmatprep.subr.mxu0 0.0
    %389 = vmatpush1.msra.mxu0 0.0
    %390 = vmatprep.subr.mxu0 0.0
    %391 = vmatpush1.msra.mxu0 0.0
    %392 = vmatprep.subr.mxu0 0.0
    %393 = vmatpush1.msra.mxu0 0.0
    %394 = vmatprep.subr.mxu0 0.0
    %395 = vmatpush1.msra.mxu0 0.0
    %396 = vmatprep.subr.mxu0 0.0
    %397 = vmatpush1.msra.mxu0 0.0
    %398 = vmatprep.subr.mxu0 0.0
    %399 = vmatpush1.msra.mxu0 0.0
    %400 = vmatprep.subr.mxu0 0.0
    %401 = vmatpush1.msra.mxu0 0.0
    %402 = vmatprep.subr.mxu0 0.0
    %403 = vmatpush1.msra.mxu0 0.0
    %404 = vmatprep.subr.mxu0 0.0
    %405 = vmatpush1.msra.mxu0 0.0
    %406 = vmatprep.subr.mxu0 0.0
    %407 = vmatpush1.msra.mxu0 0.0
    %408 = vmatprep.subr.mxu0 0.0
    %409 = vmatpush1.msra.mxu0 0.0
    %410 = vmatprep.subr.mxu0 0.0
    %411 = vmatpush1.msra.mxu0 0.0
    %412 = vmatprep.subr.mxu0 0.0
    %413 = vmatpush1.msra.mxu0 0.0
    %414 = vmatprep.subr.mxu0 0.0
    %415 = vmatpush1.msra.mxu0 0.0
    %416 = vmatprep.mubr.f32.mxu0 0.0
    %417 = vmatmul.mubr.f32.gmra.mrb[0].mxu0 %v350
    %v418 = vpop.f32.mrb[0].mxu0
    %v419 = vadd.f32 0.0, %v418
    %v420 = vpop.f32.mrb[0].mxu0
    %421 = vdwg.mxu0
    %422 = vrot.lane.b32.xlu0 %v155, 64
    %v423 = vpop.permute.xlu0 %422
    %v426 = vsel %vm166, %v345, 0
    %428 = vmatprep.subr.mxu0 0.0
    %429 = vmatpush1.msra.mxu0 %v423
    %430 = vmatprep.subr.mxu0 0.0
    %431 = vmatpush1.msra.mxu0 0.0
    %432 = vmatprep.subr.mxu0 0.0
    %433 = vmatpush1.msra.mxu0 0.0
    %434 = vmatprep.subr.mxu0 0.0
    %435 = vmatpush1.msra.mxu0 0.0
    %436 = vmatprep.subr.mxu0 0.0
    %437 = vmatpush1.msra.mxu0 0.0
    %438 = vmatprep.subr.mxu0 0.0
    %439 = vmatpush1.msra.mxu0 0.0
    %440 = vmatprep.subr.mxu0 0.0
    %441 = vmatpush1.msra.mxu0 0.0
    %442 = vmatprep.subr.mxu0 0.0
    %443 = vmatpush1.msra.mxu0 0.0
    %444 = vmatprep.subr.mxu0 0.0
    %445 = vmatpush1.msra.mxu0 0.0
    %446 = vmatprep.subr.mxu0 0.0
    %447 = vmatpush1.msra.mxu0 0.0
    %448 = vmatprep.subr.mxu0 0.0
    %449 = vmatpush1.msra.mxu0 0.0
    %450 = vmatprep.subr.mxu0 0.0
    %451 = vmatpush1.msra.mxu0 0.0
    %452 = vmatprep.subr.mxu0 0.0
    %453 = vmatpush1.msra.mxu0 0.0
    %454 = vmatprep.subr.mxu0 0.0
    %455 = vmatpush1.msra.mxu0 0.0
    %456 = vmatprep.subr.mxu0 0.0
    %457 = vmatpush1.msra.mxu0 0.0
    %458 = vmatprep.subr.mxu0 0.0
    %459 = vmatpush1.msra.mxu0 0.0
    %460 = vmatprep.subr.mxu0 0.0
    %461 = vmatpush1.msra.mxu0 0.0
    %462 = vmatprep.subr.mxu0 0.0
    %463 = vmatpush1.msra.mxu0 0.0
    %464 = vmatprep.subr.mxu0 0.0
    %465 = vmatpush1.msra.mxu0 0.0
    %466 = vmatprep.subr.mxu0 0.0
    %467 = vmatpush1.msra.mxu0 0.0
    %468 = vmatprep.subr.mxu0 0.0
    %469 = vmatpush1.msra.mxu0 0.0
    %470 = vmatprep.subr.mxu0 0.0
    %471 = vmatpush1.msra.mxu0 0.0
    %472 = vmatprep.subr.mxu0 0.0
    %473 = vmatpush1.msra.mxu0 0.0
    %474 = vmatprep.subr.mxu0 0.0
    %475 = vmatpush1.msra.mxu0 0.0
    %476 = vmatprep.subr.mxu0 0.0
    %477 = vmatpush1.msra.mxu0 0.0
    %478 = vmatprep.subr.mxu0 0.0
    %479 = vmatpush1.msra.mxu0 0.0
    %480 = vmatprep.subr.mxu0 0.0
    %481 = vmatpush1.msra.mxu0 0.0
    %482 = vmatprep.subr.mxu0 0.0
    %483 = vmatpush1.msra.mxu0 0.0
    %484 = vmatprep.subr.mxu0 0.0
    %485 = vmatpush1.msra.mxu0 0.0
    %486 = vmatprep.subr.mxu0 0.0
    %487 = vmatpush1.msra.mxu0 0.0
    %488 = vmatprep.subr.mxu0 0.0
    %489 = vmatpush1.msra.mxu0 0.0
    %490 = vmatprep.subr.mxu0 0.0
    %491 = vmatpush1.msra.mxu0 0.0
    %492 = vmatprep.mubr.f32.mxu0 0.0
    %493 = vmatmul.mubr.f32.gmra.mrb[0].mxu0 %v426
    %v494 = vpop.f32.mrb[0].mxu0
    %v495 = vadd.f32 0.0, %v494
    %v496 = vpop.f32.mrb[0].mxu0
    %497 = vdwg.mxu0
    %v498 = vld [vmem:[%s3] sm:$0xff]
    %499 = vrot.lane.b32.xlu0 %v150, 120
    %v500 = vpop.permute.xlu0 %499
    %501 = vrot.lane.b32.xlu0 %v150, 88
    %v502 = vpop.permute.xlu0 %501
    %v503 = vsel %vm166, %v500, 0
    %v505 = vsel %vm166, %v502, 0
    %507 = vmatprep.subr.mxu0 0.0
    %508 = vmatpush1.xpose.msra.mxu0 %v505
    %509 = vmatprep.subr.mxu0 0.0
    %510 = vmatpush1.xpose.msra.mxu0 0.0
    %511 = vmatprep.subr.mxu0 0.0
    %512 = vmatpush1.xpose.msra.mxu0 0.0
    %513 = vmatprep.subr.mxu0 0.0
    %514 = vmatpush1.xpose.msra.mxu0 0.0
    %515 = vmatprep.subr.mxu0 0.0
    %516 = vmatpush1.xpose.msra.mxu0 0.0
    %517 = vmatprep.subr.mxu0 0.0
    %518 = vmatpush1.xpose.msra.mxu0 0.0
    %519 = vmatprep.subr.mxu0 0.0
    %520 = vmatpush1.xpose.msra.mxu0 0.0
    %521 = vmatprep.subr.mxu0 0.0
    %522 = vmatpush1.xpose.msra.mxu0 0.0
    %523 = vmatprep.subr.mxu0 0.0
    %524 = vmatpush1.xpose.msra.mxu0 0.0
    %525 = vmatprep.subr.mxu0 0.0
    %526 = vmatpush1.xpose.msra.mxu0 0.0
    %527 = vmatprep.subr.mxu0 0.0
    %528 = vmatpush1.xpose.msra.mxu0 0.0
    %529 = vmatprep.subr.mxu0 0.0
    %530 = vmatpush1.xpose.msra.mxu0 0.0
    %531 = vmatprep.subr.mxu0 0.0
    %532 = vmatpush1.xpose.msra.mxu0 0.0
    %533 = vmatprep.subr.mxu0 0.0
    %534 = vmatpush1.xpose.msra.mxu0 0.0
    %535 = vmatprep.subr.mxu0 0.0
    %536 = vmatpush1.xpose.msra.mxu0 0.0
    %537 = vmatprep.subr.mxu0 0.0
    %538 = vmatpush1.xpose.msra.mxu0 0.0
    %539 = vmatprep.subr.mxu0 0.0
    %540 = vmatpush1.xpose.msra.mxu0 0.0
    %541 = vmatprep.subr.mxu0 0.0
    %542 = vmatpush1.xpose.msra.mxu0 0.0
    %543 = vmatprep.subr.mxu0 0.0
    %544 = vmatpush1.xpose.msra.mxu0 0.0
    %545 = vmatprep.subr.mxu0 0.0
    %546 = vmatpush1.xpose.msra.mxu0 0.0
    %547 = vmatprep.subr.mxu0 0.0
    %548 = vmatpush1.xpose.msra.mxu0 0.0
    %549 = vmatprep.subr.mxu0 0.0
    %550 = vmatpush1.xpose.msra.mxu0 0.0
    %551 = vmatprep.subr.mxu0 0.0
    %552 = vmatpush1.xpose.msra.mxu0 0.0
    %553 = vmatprep.subr.mxu0 0.0
    %554 = vmatpush1.xpose.msra.mxu0 0.0
    %555 = vmatprep.subr.mxu0 0.0
    %556 = vmatpush1.xpose.msra.mxu0 0.0
    %557 = vmatprep.subr.mxu0 0.0
    %558 = vmatpush1.xpose.msra.mxu0 0.0
    %559 = vmatprep.subr.mxu0 0.0
    %560 = vmatpush1.xpose.msra.mxu0 0.0
    %561 = vmatprep.subr.mxu0 0.0
    %562 = vmatpush1.xpose.msra.mxu0 0.0
    %563 = vmatprep.subr.mxu0 0.0
    %564 = vmatpush1.xpose.msra.mxu0 0.0
    %565 = vmatprep.subr.mxu0 0.0
    %566 = vmatpush1.xpose.msra.mxu0 0.0
    %567 = vmatprep.subr.mxu0 0.0
    %568 = vmatpush1.xpose.msra.mxu0 0.0
    %569 = vmatprep.subr.mxu0 0.0
    %570 = vmatpush1.xpose.msra.mxu0 0.0
    %571 = vmatprep.mubr.f32.mxu0 0.0
    %572 = vmatmul.mubr.f32.gmra.mrb[0].mxu0 %v503
    %v573 = vpop.f32.mrb[0].mxu0
    %v574 = vadd.f32 0.0, %v573
    %v575 = vpop.f32.mrb[0].mxu0
    %576 = vdwg.mxu0
    %577 = vrot.lane.b32.xlu0 %v155, 120
    %v578 = vpop.permute.xlu0 %577
    %579 = vrot.lane.b32.xlu0 %v155, 88
    %v580 = vpop.permute.xlu0 %579
    %v581 = vsel %vm166, %v578, 0
    %v583 = vsel %vm166, %v580, 0
    %585 = vmatprep.subr.mxu0 0.0
    %586 = vmatpush1.xpose.msra.mxu0 %v583
    %587 = vmatprep.subr.mxu0 0.0
    %588 = vmatpush1.xpose.msra.mxu0 0.0
    %589 = vmatprep.subr.mxu0 0.0
    %590 = vmatpush1.xpose.msra.mxu0 0.0
    %591 = vmatprep.subr.mxu0 0.0
    %592 = vmatpush1.xpose.msra.mxu0 0.0
    %593 = vmatprep.subr.mxu0 0.0
    %594 = vmatpush1.xpose.msra.mxu0 0.0
    %595 = vmatprep.subr.mxu0 0.0
    %596 = vmatpush1.xpose.msra.mxu0 0.0
    %597 = vmatprep.subr.mxu0 0.0
    %598 = vmatpush1.xpose.msra.mxu0 0.0
    %599 = vmatprep.subr.mxu0 0.0
    %600 = vmatpush1.xpose.msra.mxu0 0.0
    %601 = vmatprep.subr.mxu0 0.0
    %602 = vmatpush1.xpose.msra.mxu0 0.0
    %603 = vmatprep.subr.mxu0 0.0
    %604 = vmatpush1.xpose.msra.mxu0 0.0
    %605 = vmatprep.subr.mxu0 0.0
    %606 = vmatpush1.xpose.msra.mxu0 0.0
    %607 = vmatprep.subr.mxu0 0.0
    %608 = vmatpush1.xpose.msra.mxu0 0.0
    %609 = vmatprep.subr.mxu0 0.0
    %610 = vmatpush1.xpose.msra.mxu0 0.0
    %611 = vmatprep.subr.mxu0 0.0
    %612 = vmatpush1.xpose.msra.mxu0 0.0
    %613 = vmatprep.subr.mxu0 0.0
    %614 = vmatpush1.xpose.msra.mxu0 0.0
    %615 = vmatprep.subr.mxu0 0.0
    %616 = vmatpush1.xpose.msra.mxu0 0.0
    %617 = vmatprep.subr.mxu0 0.0
    %618 = vmatpush1.xpose.msra.mxu0 0.0
    %619 = vmatprep.subr.mxu0 0.0
    %620 = vmatpush1.xpose.msra.mxu0 0.0
    %621 = vmatprep.subr.mxu0 0.0
    %622 = vmatpush1.xpose.msra.mxu0 0.0
    %623 = vmatprep.subr.mxu0 0.0
    %624 = vmatpush1.xpose.msra.mxu0 0.0
    %625 = vmatprep.subr.mxu0 0.0
    %626 = vmatpush1.xpose.msra.mxu0 0.0
    %627 = vmatprep.subr.mxu0 0.0
    %628 = vmatpush1.xpose.msra.mxu0 0.0
    %629 = vmatprep.subr.mxu0 0.0
    %630 = vmatpush1.xpose.msra.mxu0 0.0
    %631 = vmatprep.subr.mxu0 0.0
    %632 = vmatpush1.xpose.msra.mxu0 0.0
    %633 = vmatprep.subr.mxu0 0.0
    %634 = vmatpush1.xpose.msra.mxu0 0.0
    %635 = vmatprep.subr.mxu0 0.0
    %636 = vmatpush1.xpose.msra.mxu0 0.0
    %637 = vmatprep.subr.mxu0 0.0
    %638 = vmatpush1.xpose.msra.mxu0 0.0
    %639 = vmatprep.subr.mxu0 0.0
    %640 = vmatpush1.xpose.msra.mxu0 0.0
    %641 = vmatprep.subr.mxu0 0.0
    %642 = vmatpush1.xpose.msra.mxu0 0.0
    %643 = vmatprep.subr.mxu0 0.0
    %644 = vmatpush1.xpose.msra.mxu0 0.0
    %645 = vmatprep.subr.mxu0 0.0
    %646 = vmatpush1.xpose.msra.mxu0 0.0
    %647 = vmatprep.subr.mxu0 0.0
    %648 = vmatpush1.xpose.msra.mxu0 0.0
    %649 = vmatprep.mubr.f32.mxu0 0.0
    %650 = vmatmul.mubr.f32.gmra.mrb[0].mxu0 %v581
    %v651 = vpop.f32.mrb[0].mxu0
    %v652 = vadd.f32 0.0, %v651
    %v653 = vpop.f32.mrb[0].mxu0
    %654 = vdwg.mxu0
    %v655 = vmul.f32 %v574, 0.35355338
    %v656 = vmul.f32 %v652, 0.35355338
    %v657 = vsel %vm321, %v655, -inf
    %v658 = vsel %vm321, %v656, -inf
    %v659 = vsel %vm166, %v657, -inf
    %660 = vmax.xlane.f32.xlu0 %v659
    %v661 = vpop.xlane.xlu0 %660
    %v662 = vsel %vm166, %v658, -inf
    %663 = vmax.xlane.f32.xlu0 %v662
    %v664 = vpop.xlane.xlu0 %663
    %v665 = vsub.f32 %v657, %v661
    %v666 = vsub.f32 %v658, %v664
    %v667 = vmul.f32 %v665, 1.442695
    %v668 = vpow.pop %v667
    %v669 = vmul.f32 %v666, 1.442695
    %v670 = vpow.pop %v669
    %v671 = vsel %vm166, %v668, 0.0
    %672 = vadd.xlane.f32.xlu0 %v671
    %v673 = vpop.xlane.xlu0 %672
    %v674 = vsel %vm166, %v670, 0.0
    %675 = vadd.xlane.f32.xlu0 %v674
    %v676 = vpop.xlane.xlu0 %675
    %v677 = vrcp.pop %v673
    %v678 = vmul.f32 %v668, %v677
    %v679 = vrcp.pop %v676
    %v680 = vmul.f32 %v670, %v679
    %681 = vrot.lane.b32.xlu0 %v150, 56
    %v682 = vpop.permute.xlu0 %681
    %v685 = vsel %vm166, %v678, 0
    %687 = vmatprep.subr.mxu0 0.0
    %688 = vmatpush1.msra.mxu0 %v682
    %689 = vmatprep.subr.mxu0 0.0
    %690 = vmatpush1.msra.mxu0 0.0
    %691 = vmatprep.subr.mxu0 0.0
    %692 = vmatpush1.msra.mxu0 0.0
    %693 = vmatprep.subr.mxu0 0.0
    %694 = vmatpush1.msra.mxu0 0.0
    %695 = vmatprep.subr.mxu0 0.0
    %696 = vmatpush1.msra.mxu0 0.0
    %697 = vmatprep.subr.mxu0 0.0
    %698 = vmatpush1.msra.mxu0 0.0
    %699 = vmatprep.subr.mxu0 0.0
    %700 = vmatpush1.msra.mxu0 0.0
    %701 = vmatprep.subr.mxu0 0.0
    %702 = vmatpush1.msra.mxu0 0.0
    %703 = vmatprep.subr.mxu0 0.0
    %704 = vmatpush1.msra.mxu0 0.0
    %705 = vmatprep.subr.mxu0 0.0
    %706 = vmatpush1.msra.mxu0 0.0
    %707 = vmatprep.subr.mxu0 0.0
    %708 = vmatpush1.msra.mxu0 0.0
    %709 = vmatprep.subr.mxu0 0.0
    %710 = vmatpush1.msra.mxu0 0.0
    %711 = vmatprep.subr.mxu0 0.0
    %712 = vmatpush1.msra.mxu0 0.0
    %713 = vmatprep.subr.mxu0 0.0
    %714 = vmatpush1.msra.mxu0 0.0
    %715 = vmatprep.subr.mxu0 0.0
    %716 = vmatpush1.msra.mxu0 0.0
    %717 = vmatprep.subr.mxu0 0.0
    %718 = vmatpush1.msra.mxu0 0.0
    %719 = vmatprep.subr.mxu0 0.0
    %720 = vmatpush1.msra.mxu0 0.0
    %721 = vmatprep.subr.mxu0 0.0
    %722 = vmatpush1.msra.mxu0 0.0
    %723 = vmatprep.subr.mxu0 0.0
    %724 = vmatpush1.msra.mxu0 0.0
    %725 = vmatprep.subr.mxu0 0.0
    %726 = vmatpush1.msra.mxu0 0.0
    %727 = vmatprep.subr.mxu0 0.0
    %728 = vmatpush1.msra.mxu0 0.0
    %729 = vmatprep.subr.mxu0 0.0
    %730 = vmatpush1.msra.mxu0 0.0
    %731 = vmatprep.subr.mxu0 0.0
    %732 = vmatpush1.msra.mxu0 0.0
    %733 = vmatprep.subr.mxu0 0.0
    %734 = vmatpush1.msra.mxu0 0.0
    %735 = vmatprep.subr.mxu0 0.0
    %736 = vmatpush1.msra.mxu0 0.0
    %737 = vmatprep.subr.mxu0 0.0
    %738 = vmatpush1.msra.mxu0 0.0
    %739 = vmatprep.subr.mxu0 0.0
    %740 = vmatpush1.msra.mxu0 0.0
    %741 = vmatprep.subr.mxu0 0.0
    %742 = vmatpush1.msra.mxu0 0.0
    %743 = vmatprep.subr.mxu0 0.0
    %744 = vmatpush1.msra.mxu0 0.0
    %745 = vmatprep.subr.mxu0 0.0
    %746 = vmatpush1.msra.mxu0 0.0
    %747 = vmatprep.subr.mxu0 0.0
    %748 = vmatpush1.msra.mxu0 0.0
    %749 = vmatprep.subr.mxu0 0.0
    %750 = vmatpush1.msra.mxu0 0.0
    %751 = vmatprep.mubr.f32.mxu0 0.0
    %752 = vmatmul.mubr.f32.gmra.mrb[0].mxu0 %v685
    %v753 = vpop.f32.mrb[0].mxu0
    %v754 = vadd.f32 0.0, %v753
    %v755 = vpop.f32.mrb[0].mxu0
    %756 = vdwg.mxu0
    %757 = vrot.lane.b32.xlu0 %v155, 56
    %v758 = vpop.permute.xlu0 %757
    %v761 = vsel %vm166, %v680, 0
    %763 = vmatprep.subr.mxu0 0.0
    %764 = vmatpush1.msra.mxu0 %v758
    %765 = vmatprep.subr.mxu0 0.0
    %766 = vmatpush1.msra.mxu0 0.0
    %767 = vmatprep.subr.mxu0 0.0
    %768 = vmatpush1.msra.mxu0 0.0
    %769 = vmatprep.subr.mxu0 0.0
    %770 = vmatpush1.msra.mxu0 0.0
    %771 = vmatprep.subr.mxu0 0.0
    %772 = vmatpush1.msra.mxu0 0.0
    %773 = vmatprep.subr.mxu0 0.0
    %774 = vmatpush1.msra.mxu0 0.0
    %775 = vmatprep.subr.mxu0 0.0
    %776 = vmatpush1.msra.mxu0 0.0
    %777 = vmatprep.subr.mxu0 0.0
    %778 = vmatpush1.msra.mxu0 0.0
    %779 = vmatprep.subr.mxu0 0.0
    %780 = vmatpush1.msra.mxu0 0.0
    %781 = vmatprep.subr.mxu0 0.0
    %782 = vmatpush1.msra.mxu0 0.0
    %783 = vmatprep.subr.mxu0 0.0
    %784 = vmatpush1.msra.mxu0 0.0
    %785 = vmatprep.subr.mxu0 0.0
    %786 = vmatpush1.msra.mxu0 0.0
    %787 = vmatprep.subr.mxu0 0.0
    %788 = vmatpush1.msra.mxu0 0.0
    %789 = vmatprep.subr.mxu0 0.0
    %790 = vmatpush1.msra.mxu0 0.0
    %791 = vmatprep.subr.mxu0 0.0
    %792 = vmatpush1.msra.mxu0 0.0
    %793 = vmatprep.subr.mxu0 0.0
    %794 = vmatpush1.msra.mxu0 0.0
    %795 = vmatprep.subr.mxu0 0.0
    %796 = vmatpush1.msra.mxu0 0.0
    %797 = vmatprep.subr.mxu0 0.0
    %798 = vmatpush1.msra.mxu0 0.0
    %799 = vmatprep.subr.mxu0 0.0
    %800 = vmatpush1.msra.mxu0 0.0
    %801 = vmatprep.subr.mxu0 0.0
    %802 = vmatpush1.msra.mxu0 0.0
    %803 = vmatprep.subr.mxu0 0.0
    %804 = vmatpush1.msra.mxu0 0.0
    %805 = vmatprep.subr.mxu0 0.0
    %806 = vmatpush1.msra.mxu0 0.0
    %807 = vmatprep.subr.mxu0 0.0
    %808 = vmatpush1.msra.mxu0 0.0
    %809 = vmatprep.subr.mxu0 0.0
    %810 = vmatpush1.msra.mxu0 0.0
    %811 = vmatprep.subr.mxu0 0.0
    %812 = vmatpush1.msra.mxu0 0.0
    %813 = vmatprep.subr.mxu0 0.0
    %814 = vmatpush1.msra.mxu0 0.0
    %815 = vmatprep.subr.mxu0 0.0
    %816 = vmatpush1.msra.mxu0 0.0
    %817 = vmatprep.subr.mxu0 0.0
    %818 = vmatpush1.msra.mxu0 0.0
    %819 = vmatprep.subr.mxu0 0.0
    %820 = vmatpush1.msra.mxu0 0.0
    %821 = vmatprep.subr.mxu0 0.0
    %822 = vmatpush1.msra.mxu0 0.0
    %823 = vmatprep.subr.mxu0 0.0
    %824 = vmatpush1.msra.mxu0 0.0
    %825 = vmatprep.subr.mxu0 0.0
    %826 = vmatpush1.msra.mxu0 0.0
    %827 = vmatprep.mubr.f32.mxu0 0.0
    %828 = vmatmul.mubr.f32.gmra.mrb[0].mxu0 %v761
    %v829 = vpop.f32.mrb[0].mxu0
    %v830 = vadd.f32 0.0, %v829
    %v831 = vpop.f32.mrb[0].mxu0
    %832 = vdwg.mxu0
    %s833 = scalar_lea.vmem %s3, 8
    %v834 = vld [vmem:[%s833] sm:$0xff]
    %v836 = vsel %vm166, %v754, 0
    %v839 = vsel %vm166, %v830, 0
    %841 = vmatprep.subr.mxu0 0.0
    %842 = vmatpush1.msra.mxu0 %v834
    %843 = vmatprep.subr.mxu0 0.0
    %844 = vmatpush1.msra.mxu0 0.0
    %845 = vmatprep.subr.mxu0 0.0
    %846 = vmatpush1.msra.mxu0 0.0
    %847 = vmatprep.subr.mxu0 0.0
    %848 = vmatpush1.msra.mxu0 0.0
    %849 = vmatprep.subr.mxu0 0.0
    %850 = vmatpush1.msra.mxu0 0.0
    %851 = vmatprep.subr.mxu0 0.0
    %852 = vmatpush1.msra.mxu0 0.0
    %853 = vmatprep.subr.mxu0 0.0
    %854 = vmatpush1.msra.mxu0 0.0
    %855 = vmatprep.subr.mxu0 0.0
    %856 = vmatpush1.msra.mxu0 0.0
    %857 = vmatprep.subr.mxu0 0.0
    %858 = vmatpush1.msra.mxu0 0.0
    %859 = vmatprep.subr.mxu0 0.0
    %860 = vmatpush1.msra.mxu0 0.0
    %861 = vmatprep.subr.mxu0 0.0
    %862 = vmatpush1.msra.mxu0 0.0
    %863 = vmatprep.subr.mxu0 0.0
    %864 = vmatpush1.msra.mxu0 0.0
    %865 = vmatprep.subr.mxu0 0.0
    %866 = vmatpush1.msra.mxu0 0.0
    %867 = vmatprep.subr.mxu0 0.0
    %868 = vmatpush1.msra.mxu0 0.0
    %869 = vmatprep.subr.mxu0 0.0
    %870 = vmatpush1.msra.mxu0 0.0
    %871 = vmatprep.subr.mxu0 0.0
    %872 = vmatpush1.msra.mxu0 0.0
    %873 = vmatprep.subr.mxu0 0.0
    %874 = vmatpush1.msra.mxu0 0.0
    %875 = vmatprep.subr.mxu0 0.0
    %876 = vmatpush1.msra.mxu0 0.0
    %877 = vmatprep.subr.mxu0 0.0
    %878 = vmatpush1.msra.mxu0 0.0
    %879 = vmatprep.subr.mxu0 0.0
    %880 = vmatpush1.msra.mxu0 0.0
    %881 = vmatprep.subr.mxu0 0.0
    %882 = vmatpush1.msra.mxu0 0.0
    %883 = vmatprep.subr.mxu0 0.0
    %884 = vmatpush1.msra.mxu0 0.0
    %885 = vmatprep.subr.mxu0 0.0
    %886 = vmatpush1.msra.mxu0 0.0
    %887 = vmatprep.subr.mxu0 0.0
    %888 = vmatpush1.msra.mxu0 0.0
    %889 = vmatprep.subr.mxu0 0.0
    %890 = vmatpush1.msra.mxu0 0.0
    %891 = vmatprep.subr.mxu0 0.0
    %892 = vmatpush1.msra.mxu0 0.0
    %893 = vmatprep.subr.mxu0 0.0
    %894 = vmatpush1.msra.mxu0 0.0
    %895 = vmatprep.subr.mxu0 0.0
    %896 = vmatpush1.msra.mxu0 0.0
    %897 = vmatprep.subr.mxu0 0.0
    %898 = vmatpush1.msra.mxu0 0.0
    %899 = vmatprep.subr.mxu0 0.0
    %900 = vmatpush1.msra.mxu0 0.0
    %901 = vmatprep.subr.mxu0 0.0
    %902 = vmatpush1.msra.mxu0 0.0
    %903 = vmatprep.subr.mxu0 0.0
    %904 = vmatpush1.msra.mxu0 0.0
    %905 = vmatprep.mubr.f32.mxu0 0.0
    %906 = vmatmul.mubr.f32.gmra.mrb[0].mxu0 %v836
    %v907 = vpop.f32.mrb[0].mxu0
    %v908 = vadd.f32 0.0, %v907
    %v909 = vpop.f32.mrb[0].mxu0
    %910 = vmatprep.mubr.f32.mxu0 0.0
    %911 = vmatmul.mubr.f32.gmra.mrb[0].mxu0 %v839
    %v912 = vpop.f32.mrb[0].mxu0
    %v913 = vadd.f32 0.0, %v912
    %v914 = vpop.f32.mrb[0].mxu0
    %915 = vdwg.mxu0
    %v917 = vsel %vm166, %v419, 0
    %v920 = vsel %vm166, %v495, 0
    %922 = vmatprep.subr.mxu0 0.0
    %923 = vmatpush1.msra.mxu0 %v498
    %924 = vmatprep.subr.mxu0 0.0
    %925 = vmatpush1.msra.mxu0 0.0
    %926 = vmatprep.subr.mxu0 0.0
    %927 = vmatpush1.msra.mxu0 0.0
    %928 = vmatprep.subr.mxu0 0.0
    %929 = vmatpush1.msra.mxu0 0.0
    %930 = vmatprep.subr.mxu0 0.0
    %931 = vmatpush1.msra.mxu0 0.0
    %932 = vmatprep.subr.mxu0 0.0
    %933 = vmatpush1.msra.mxu0 0.0
    %934 = vmatprep.subr.mxu0 0.0
    %935 = vmatpush1.msra.mxu0 0.0
    %936 = vmatprep.subr.mxu0 0.0
    %937 = vmatpush1.msra.mxu0 0.0
    %938 = vmatprep.subr.mxu0 0.0
    %939 = vmatpush1.msra.mxu0 0.0
    %940 = vmatprep.subr.mxu0 0.0
    %941 = vmatpush1.msra.mxu0 0.0
    %942 = vmatprep.subr.mxu0 0.0
    %943 = vmatpush1.msra.mxu0 0.0
    %944 = vmatprep.subr.mxu0 0.0
    %945 = vmatpush1.msra.mxu0 0.0
    %946 = vmatprep.subr.mxu0 0.0
    %947 = vmatpush1.msra.mxu0 0.0
    %948 = vmatprep.subr.mxu0 0.0
    %949 = vmatpush1.msra.mxu0 0.0
    %950 = vmatprep.subr.mxu0 0.0
    %951 = vmatpush1.msra.mxu0 0.0
    %952 = vmatprep.subr.mxu0 0.0
    %953 = vmatpush1.msra.mxu0 0.0
    %954 = vmatprep.subr.mxu0 0.0
    %955 = vmatpush1.msra.mxu0 0.0
    %956 = vmatprep.subr.mxu0 0.0
    %957 = vmatpush1.msra.mxu0 0.0
    %958 = vmatprep.subr.mxu0 0.0
    %959 = vmatpush1.msra.mxu0 0.0
    %960 = vmatprep.subr.mxu0 0.0
    %961 = vmatpush1.msra.mxu0 0.0
    %962 = vmatprep.subr.mxu0 0.0
    %963 = vmatpush1.msra.mxu0 0.0
    %964 = vmatprep.subr.mxu0 0.0
    %965 = vmatpush1.msra.mxu0 0.0
    %966 = vmatprep.subr.mxu0 0.0
    %967 = vmatpush1.msra.mxu0 0.0
    %968 = vmatprep.subr.mxu0 0.0
    %969 = vmatpush1.msra.mxu0 0.0
    %970 = vmatprep.subr.mxu0 0.0
    %971 = vmatpush1.msra.mxu0 0.0
    %972 = vmatprep.subr.mxu0 0.0
    %973 = vmatpush1.msra.mxu0 0.0
    %974 = vmatprep.subr.mxu0 0.0
    %975 = vmatpush1.msra.mxu0 0.0
    %976 = vmatprep.subr.mxu0 0.0
    %977 = vmatpush1.msra.mxu0 0.0
    %978 = vmatprep.subr.mxu0 0.0
    %979 = vmatpush1.msra.mxu0 0.0
    %980 = vmatprep.subr.mxu0 0.0
    %981 = vmatpush1.msra.mxu0 0.0
    %982 = vmatprep.subr.mxu0 0.0
    %983 = vmatpush1.msra.mxu0 0.0
    %984 = vmatprep.subr.mxu0 0.0
    %985 = vmatpush1.msra.mxu0 0.0
    %986 = vmatprep.mubr.f32.mxu0 0.0
    %987 = vmatmul.mubr.f32.gmra.mrb[0].mxu0 %v917
    %v988 = vpop.f32.mrb[0].mxu0
    %v989 = vadd.f32 %v908, %v988
    %v990 = vpop.f32.mrb[0].mxu0
    %991 = vmatprep.mubr.f32.mxu0 0.0
    %992 = vmatmul.mubr.f32.gmra.mrb[0].mxu0 %v920
    %v993 = vpop.f32.mrb[0].mxu0
    %v994 = vadd.f32 %v913, %v993
    %v995 = vpop.f32.mrb[0].mxu0
    %996 = vdwg.mxu0
    %997 = vrot.lane.b32.xlu0 %v150, 112
    %v998 = vpop.permute.xlu0 %997
    %999 = vrot.lane.b32.xlu0 %v150, 80
    %v1000 = vpop.permute.xlu0 %999
    %v1001 = vsel %vm166, %v998, 0
    %v1003 = vsel %vm166, %v1000, 0
    %1005 = vmatprep.subr.mxu0 0.0
    %1006 = vmatpush1.xpose.msra.mxu0 %v1003
    %1007 = vmatprep.subr.mxu0 0.0
    %1008 = vmatpush1.xpose.msra.mxu0 0.0
    %1009 = vmatprep.subr.mxu0 0.0
    %1010 = vmatpush1.xpose.msra.mxu0 0.0
    %1011 = vmatprep.subr.mxu0 0.0
    %1012 = vmatpush1.xpose.msra.mxu0 0.0
    %1013 = vmatprep.subr.mxu0 0.0
    %1014 = vmatpush1.xpose.msra.mxu0 0.0
    %1015 = vmatprep.subr.mxu0 0.0
    %1016 = vmatpush1.xpose.msra.mxu0 0.0
    %1017 = vmatprep.subr.mxu0 0.0
    %1018 = vmatpush1.xpose.msra.mxu0 0.0
    %1019 = vmatprep.subr.mxu0 0.0
    %1020 = vmatpush1.xpose.msra.mxu0 0.0
    %1021 = vmatprep.subr.mxu0 0.0
    %1022 = vmatpush1.xpose.msra.mxu0 0.0
    %1023 = vmatprep.subr.mxu0 0.0
    %1024 = vmatpush1.xpose.msra.mxu0 0.0
    %1025 = vmatprep.subr.mxu0 0.0
    %1026 = vmatpush1.xpose.msra.mxu0 0.0
    %1027 = vmatprep.subr.mxu0 0.0
    %1028 = vmatpush1.xpose.msra.mxu0 0.0
    %1029 = vmatprep.subr.mxu0 0.0
    %1030 = vmatpush1.xpose.msra.mxu0 0.0
    %1031 = vmatprep.subr.mxu0 0.0
    %1032 = vmatpush1.xpose.msra.mxu0 0.0
    %1033 = vmatprep.subr.mxu0 0.0
    %1034 = vmatpush1.xpose.msra.mxu0 0.0
    %1035 = vmatprep.subr.mxu0 0.0
    %1036 = vmatpush1.xpose.msra.mxu0 0.0
    %1037 = vmatprep.subr.mxu0 0.0
    %1038 = vmatpush1.xpose.msra.mxu0 0.0
    %1039 = vmatprep.subr.mxu0 0.0
    %1040 = vmatpush1.xpose.msra.mxu0 0.0
    %1041 = vmatprep.subr.mxu0 0.0
    %1042 = vmatpush1.xpose.msra.mxu0 0.0
    %1043 = vmatprep.subr.mxu0 0.0
    %1044 = vmatpush1.xpose.msra.mxu0 0.0
    %1045 = vmatprep.subr.mxu0 0.0
    %1046 = vmatpush1.xpose.msra.mxu0 0.0
    %1047 = vmatprep.subr.mxu0 0.0
    %1048 = vmatpush1.xpose.msra.mxu0 0.0
    %1049 = vmatprep.subr.mxu0 0.0
    %1050 = vmatpush1.xpose.msra.mxu0 0.0
    %1051 = vmatprep.subr.mxu0 0.0
    %1052 = vmatpush1.xpose.msra.mxu0 0.0
    %1053 = vmatprep.subr.mxu0 0.0
    %1054 = vmatpush1.xpose.msra.mxu0 0.0
    %1055 = vmatprep.subr.mxu0 0.0
    %1056 = vmatpush1.xpose.msra.mxu0 0.0
    %1057 = vmatprep.subr.mxu0 0.0
    %1058 = vmatpush1.xpose.msra.mxu0 0.0
    %1059 = vmatprep.subr.mxu0 0.0
    %1060 = vmatpush1.xpose.msra.mxu0 0.0
    %1061 = vmatprep.subr.mxu0 0.0
    %1062 = vmatpush1.xpose.msra.mxu0 0.0
    %1063 = vmatprep.subr.mxu0 0.0
    %1064 = vmatpush1.xpose.msra.mxu0 0.0
    %1065 = vmatprep.subr.mxu0 0.0
    %1066 = vmatpush1.xpose.msra.mxu0 0.0
    %1067 = vmatprep.subr.mxu0 0.0
    %1068 = vmatpush1.xpose.msra.mxu0 0.0
    %1069 = vmatprep.mubr.f32.mxu0 0.0
    %1070 = vmatmul.mubr.f32.gmra.mrb[0].mxu0 %v1001
    %v1071 = vpop.f32.mrb[0].mxu0
    %v1072 = vadd.f32 0.0, %v1071
    %v1073 = vpop.f32.mrb[0].mxu0
    %1074 = vdwg.mxu0
    %1075 = vrot.lane.b32.xlu0 %v155, 112
    %v1076 = vpop.permute.xlu0 %1075
    %1077 = vrot.lane.b32.xlu0 %v155, 80
    %v1078 = vpop.permute.xlu0 %1077
    %v1079 = vsel %vm166, %v1076, 0
    %v1081 = vsel %vm166, %v1078, 0
    %1083 = vmatprep.subr.mxu0 0.0
    %1084 = vmatpush1.xpose.msra.mxu0 %v1081
    %1085 = vmatprep.subr.mxu0 0.0
    %1086 = vmatpush1.xpose.msra.mxu0 0.0
    %1087 = vmatprep.subr.mxu0 0.0
    %1088 = vmatpush1.xpose.msra.mxu0 0.0
    %1089 = vmatprep.subr.mxu0 0.0
    %1090 = vmatpush1.xpose.msra.mxu0 0.0
    %1091 = vmatprep.subr.mxu0 0.0
    %1092 = vmatpush1.xpose.msra.mxu0 0.0
    %1093 = vmatprep.subr.mxu0 0.0
    %1094 = vmatpush1.xpose.msra.mxu0 0.0
    %1095 = vmatprep.subr.mxu0 0.0
    %1096 = vmatpush1.xpose.msra.mxu0 0.0
    %1097 = vmatprep.subr.mxu0 0.0
    %1098 = vmatpush1.xpose.msra.mxu0 0.0
    %1099 = vmatprep.subr.mxu0 0.0
    %1100 = vmatpush1.xpose.msra.mxu0 0.0
    %1101 = vmatprep.subr.mxu0 0.0
    %1102 = vmatpush1.xpose.msra.mxu0 0.0
    %1103 = vmatprep.subr.mxu0 0.0
    %1104 = vmatpush1.xpose.msra.mxu0 0.0
    %1105 = vmatprep.subr.mxu0 0.0
    %1106 = vmatpush1.xpose.msra.mxu0 0.0
    %1107 = vmatprep.subr.mxu0 0.0
    %1108 = vmatpush1.xpose.msra.mxu0 0.0
    %1109 = vmatprep.subr.mxu0 0.0
    %1110 = vmatpush1.xpose.msra.mxu0 0.0
    %1111 = vmatprep.subr.mxu0 0.0
    %1112 = vmatpush1.xpose.msra.mxu0 0.0
    %1113 = vmatprep.subr.mxu0 0.0
    %1114 = vmatpush1.xpose.msra.mxu0 0.0
    %1115 = vmatprep.subr.mxu0 0.0
    %1116 = vmatpush1.xpose.msra.mxu0 0.0
    %1117 = vmatprep.subr.mxu0 0.0
    %1118 = vmatpush1.xpose.msra.mxu0 0.0
    %1119 = vmatprep.subr.mxu0 0.0
    %1120 = vmatpush1.xpose.msra.mxu0 0.0
    %1121 = vmatprep.subr.mxu0 0.0
    %1122 = vmatpush1.xpose.msra.mxu0 0.0
    %1123 = vmatprep.subr.mxu0 0.0
    %1124 = vmatpush1.xpose.msra.mxu0 0.0
    %1125 = vmatprep.subr.mxu0 0.0
    %1126 = vmatpush1.xpose.msra.mxu0 0.0
    %1127 = vmatprep.subr.mxu0 0.0
    %1128 = vmatpush1.xpose.msra.mxu0 0.0
    %1129 = vmatprep.subr.mxu0 0.0
    %1130 = vmatpush1.xpose.msra.mxu0 0.0
    %1131 = vmatprep.subr.mxu0 0.0
    %1132 = vmatpush1.xpose.msra.mxu0 0.0
    %1133 = vmatprep.subr.mxu0 0.0
    %1134 = vmatpush1.xpose.msra.mxu0 0.0
    %1135 = vmatprep.subr.mxu0 0.0
    %1136 = vmatpush1.xpose.msra.mxu0 0.0
    %1137 = vmatprep.subr.mxu0 0.0
    %1138 = vmatpush1.xpose.msra.mxu0 0.0
    %1139 = vmatprep.subr.mxu0 0.0
    %1140 = vmatpush1.xpose.msra.mxu0 0.0
    %1141 = vmatprep.subr.mxu0 0.0
    %1142 = vmatpush1.xpose.msra.mxu0 0.0
    %1143 = vmatprep.subr.mxu0 0.0
    %1144 = vmatpush1.xpose.msra.mxu0 0.0
    %1145 = vmatprep.subr.mxu0 0.0
    %1146 = vmatpush1.xpose.msra.mxu0 0.0
    %1147 = vmatprep.mubr.f32.mxu0 0.0
    %1148 = vmatmul.mubr.f32.gmra.mrb[0].mxu0 %v1079
    %v1149 = vpop.f32.mrb[0].mxu0
    %v1150 = vadd.f32 0.0, %v1149
    %v1151 = vpop.f32.mrb[0].mxu0
    %1152 = vdwg.mxu0
    %v1153 = vmul.f32 %v1072, 0.35355338
    %v1154 = vmul.f32 %v1150, 0.35355338
    %v1155 = vsel %vm321, %v1153, -inf
    %v1156 = vsel %vm321, %v1154, -inf
    %v1157 = vsel %vm166, %v1155, -inf
    %1158 = vmax.xlane.f32.xlu0 %v1157
    %v1159 = vpop.xlane.xlu0 %1158
    %v1160 = vsel %vm166, %v1156, -inf
    %1161 = vmax.xlane.f32.xlu0 %v1160
    %v1162 = vpop.xlane.xlu0 %1161
    %v1163 = vsub.f32 %v1155, %v1159
    %v1164 = vsub.f32 %v1156, %v1162
    %v1165 = vmul.f32 %v1163, 1.442695
    %v1166 = vpow.pop %v1165
    %v1167 = vmul.f32 %v1164, 1.442695
    %v1168 = vpow.pop %v1167
    %v1169 = vsel %vm166, %v1166, 0.0
    %1170 = vadd.xlane.f32.xlu0 %v1169
    %v1171 = vpop.xlane.xlu0 %1170
    %v1172 = vsel %vm166, %v1168, 0.0
    %1173 = vadd.xlane.f32.xlu0 %v1172
    %v1174 = vpop.xlane.xlu0 %1173
    %v1175 = vrcp.pop %v1171
    %v1176 = vmul.f32 %v1166, %v1175
    %v1177 = vrcp.pop %v1174
    %v1178 = vmul.f32 %v1168, %v1177
    %1179 = vrot.lane.b32.xlu0 %v150, 48
    %v1180 = vpop.permute.xlu0 %1179
    %v1183 = vsel %vm166, %v1176, 0
    %1185 = vmatprep.subr.mxu0 0.0
    %1186 = vmatpush1.msra.mxu0 %v1180
    %1187 = vmatprep.subr.mxu0 0.0
    %1188 = vmatpush1.msra.mxu0 0.0
    %1189 = vmatprep.subr.mxu0 0.0
    %1190 = vmatpush1.msra.mxu0 0.0
    %1191 = vmatprep.subr.mxu0 0.0
    %1192 = vmatpush1.msra.mxu0 0.0
    %1193 = vmatprep.subr.mxu0 0.0
    %1194 = vmatpush1.msra.mxu0 0.0
    %1195 = vmatprep.subr.mxu0 0.0
    %1196 = vmatpush1.msra.mxu0 0.0
    %1197 = vmatprep.subr.mxu0 0.0
    %1198 = vmatpush1.msra.mxu0 0.0
    %1199 = vmatprep.subr.mxu0 0.0
    %1200 = vmatpush1.msra.mxu0 0.0
    %1201 = vmatprep.subr.mxu0 0.0
    %1202 = vmatpush1.msra.mxu0 0.0
    %1203 = vmatprep.subr.mxu0 0.0
    %1204 = vmatpush1.msra.mxu0 0.0
    %1205 = vmatprep.subr.mxu0 0.0
    %1206 = vmatpush1.msra.mxu0 0.0
    %1207 = vmatprep.subr.mxu0 0.0
    %1208 = vmatpush1.msra.mxu0 0.0
    %1209 = vmatprep.subr.mxu0 0.0
    %1210 = vmatpush1.msra.mxu0 0.0
    %1211 = vmatprep.subr.mxu0 0.0
    %1212 = vmatpush1.msra.mxu0 0.0
    %1213 = vmatprep.subr.mxu0 0.0
    %1214 = vmatpush1.msra.mxu0 0.0
    %1215 = vmatprep.subr.mxu0 0.0
    %1216 = vmatpush1.msra.mxu0 0.0
    %1217 = vmatprep.subr.mxu0 0.0
    %1218 = vmatpush1.msra.mxu0 0.0
    %1219 = vmatprep.subr.mxu0 0.0
    %1220 = vmatpush1.msra.mxu0 0.0
    %1221 = vmatprep.subr.mxu0 0.0
    %1222 = vmatpush1.msra.mxu0 0.0
    %1223 = vmatprep.subr.mxu0 0.0
    %1224 = vmatpush1.msra.mxu0 0.0
    %1225 = vmatprep.subr.mxu0 0.0
    %1226 = vmatpush1.msra.mxu0 0.0
    %1227 = vmatprep.subr.mxu0 0.0
    %1228 = vmatpush1.msra.mxu0 0.0
    %1229 = vmatprep.subr.mxu0 0.0
    %1230 = vmatpush1.msra.mxu0 0.0
    %1231 = vmatprep.subr.mxu0 0.0
    %1232 = vmatpush1.msra.mxu0 0.0
    %1233 = vmatprep.subr.mxu0 0.0
    %1234 = vmatpush1.msra.mxu0 0.0
    %1235 = vmatprep.subr.mxu0 0.0
    %1236 = vmatpush1.msra.mxu0 0.0
    %1237 = vmatprep.subr.mxu0 0.0
    %1238 = vmatpush1.msra.mxu0 0.0
    %1239 = vmatprep.subr.mxu0 0.0
    %1240 = vmatpush1.msra.mxu0 0.0
    %1241 = vmatprep.subr.mxu0 0.0
    %1242 = vmatpush1.msra.mxu0 0.0
    %1243 = vmatprep.subr.mxu0 0.0
    %1244 = vmatpush1.msra.mxu0 0.0
    %1245 = vmatprep.subr.mxu0 0.0
    %1246 = vmatpush1.msra.mxu0 0.0
    %1247 = vmatprep.subr.mxu0 0.0
    %1248 = vmatpush1.msra.mxu0 0.0
    %1249 = vmatprep.mubr.f32.mxu0 0.0
    %1250 = vmatmul.mubr.f32.gmra.mrb[0].mxu0 %v1183
    %v1251 = vpop.f32.mrb[0].mxu0
    %v1252 = vadd.f32 0.0, %v1251
    %v1253 = vpop.f32.mrb[0].mxu0
    %1254 = vdwg.mxu0
    %1255 = vrot.lane.b32.xlu0 %v155, 48
    %v1256 = vpop.permute.xlu0 %1255
    %v1259 = vsel %vm166, %v1178, 0
    %1261 = vmatprep.subr.mxu0 0.0
    %1262 = vmatpush1.msra.mxu0 %v1256
    %1263 = vmatprep.subr.mxu0 0.0
    %1264 = vmatpush1.msra.mxu0 0.0
    %1265 = vmatprep.subr.mxu0 0.0
    %1266 = vmatpush1.msra.mxu0 0.0
    %1267 = vmatprep.subr.mxu0 0.0
    %1268 = vmatpush1.msra.mxu0 0.0
    %1269 = vmatprep.subr.mxu0 0.0
    %1270 = vmatpush1.msra.mxu0 0.0
    %1271 = vmatprep.subr.mxu0 0.0
    %1272 = vmatpush1.msra.mxu0 0.0
    %1273 = vmatprep.subr.mxu0 0.0
    %1274 = vmatpush1.msra.mxu0 0.0
    %1275 = vmatprep.subr.mxu0 0.0
    %1276 = vmatpush1.msra.mxu0 0.0
    %1277 = vmatprep.subr.mxu0 0.0
    %1278 = vmatpush1.msra.mxu0 0.0
    %1279 = vmatprep.subr.mxu0 0.0
    %1280 = vmatpush1.msra.mxu0 0.0
    %1281 = vmatprep.subr.mxu0 0.0
    %1282 = vmatpush1.msra.mxu0 0.0
    %1283 = vmatprep.subr.mxu0 0.0
    %1284 = vmatpush1.msra.mxu0 0.0
    %1285 = vmatprep.subr.mxu0 0.0
    %1286 = vmatpush1.msra.mxu0 0.0
    %1287 = vmatprep.subr.mxu0 0.0
    %1288 = vmatpush1.msra.mxu0 0.0
    %1289 = vmatprep.subr.mxu0 0.0
    %1290 = vmatpush1.msra.mxu0 0.0
    %1291 = vmatprep.subr.mxu0 0.0
    %1292 = vmatpush1.msra.mxu0 0.0
    %1293 = vmatprep.subr.mxu0 0.0
    %1294 = vmatpush1.msra.mxu0 0.0
    %1295 = vmatprep.subr.mxu0 0.0
    %1296 = vmatpush1.msra.mxu0 0.0
    %1297 = vmatprep.subr.mxu0 0.0
    %1298 = vmatpush1.msra.mxu0 0.0
    %1299 = vmatprep.subr.mxu0 0.0
    %1300 = vmatpush1.msra.mxu0 0.0
    %1301 = vmatprep.subr.mxu0 0.0
    %1302 = vmatpush1.msra.mxu0 0.0
    %1303 = vmatprep.subr.mxu0 0.0
    %1304 = vmatpush1.msra.mxu0 0.0
    %1305 = vmatprep.subr.mxu0 0.0
    %1306 = vmatpush1.msra.mxu0 0.0
    %1307 = vmatprep.subr.mxu0 0.0
    %1308 = vmatpush1.msra.mxu0 0.0
    %1309 = vmatprep.subr.mxu0 0.0
    %1310 = vmatpush1.msra.mxu0 0.0
    %1311 = vmatprep.subr.mxu0 0.0
    %1312 = vmatpush1.msra.mxu0 0.0
    %1313 = vmatprep.subr.mxu0 0.0
    %1314 = vmatpush1.msra.mxu0 0.0
    %1315 = vmatprep.subr.mxu0 0.0
    %1316 = vmatpush1.msra.mxu0 0.0
    %1317 = vmatprep.subr.mxu0 0.0
    %1318 = vmatpush1.msra.mxu0 0.0
    %1319 = vmatprep.subr.mxu0 0.0
    %1320 = vmatpush1.msra.mxu0 0.0
    %1321 = vmatprep.subr.mxu0 0.0
    %1322 = vmatpush1.msra.mxu0 0.0
    %1323 = vmatprep.subr.mxu0 0.0
    %1324 = vmatpush1.msra.mxu0 0.0
    %1325 = vmatprep.mubr.f32.mxu0 0.0
    %1326 = vmatmul.mubr.f32.gmra.mrb[0].mxu0 %v1259
    %v1327 = vpop.f32.mrb[0].mxu0
    %v1328 = vadd.f32 0.0, %v1327
    %v1329 = vpop.f32.mrb[0].mxu0
    %1330 = vdwg.mxu0
    %s1331 = scalar_lea.vmem %s3, 16
    %v1332 = vld [vmem:[%s1331] sm:$0xff]
    %v1334 = vsel %vm166, %v1252, 0
    %v1337 = vsel %vm166, %v1328, 0
    %1339 = vmatprep.subr.mxu0 0.0
    %1340 = vmatpush1.msra.mxu0 %v1332
    %1341 = vmatprep.subr.mxu0 0.0
    %1342 = vmatpush1.msra.mxu0 0.0
    %1343 = vmatprep.subr.mxu0 0.0
    %1344 = vmatpush1.msra.mxu0 0.0
    %1345 = vmatprep.subr.mxu0 0.0
    %1346 = vmatpush1.msra.mxu0 0.0
    %1347 = vmatprep.subr.mxu0 0.0
    %1348 = vmatpush1.msra.mxu0 0.0
    %1349 = vmatprep.subr.mxu0 0.0
    %1350 = vmatpush1.msra.mxu0 0.0
    %1351 = vmatprep.subr.mxu0 0.0
    %1352 = vmatpush1.msra.mxu0 0.0
    %1353 = vmatprep.subr.mxu0 0.0
    %1354 = vmatpush1.msra.mxu0 0.0
    %1355 = vmatprep.subr.mxu0 0.0
    %1356 = vmatpush1.msra.mxu0 0.0
    %1357 = vmatprep.subr.mxu0 0.0
    %1358 = vmatpush1.msra.mxu0 0.0
    %1359 = vmatprep.subr.mxu0 0.0
    %1360 = vmatpush1.msra.mxu0 0.0
    %1361 = vmatprep.subr.mxu0 0.0
    %1362 = vmatpush1.msra.mxu0 0.0
    %1363 = vmatprep.subr.mxu0 0.0
    %1364 = vmatpush1.msra.mxu0 0.0
    %1365 = vmatprep.subr.mxu0 0.0
    %1366 = vmatpush1.msra.mxu0 0.0
    %1367 = vmatprep.subr.mxu0 0.0
    %1368 = vmatpush1.msra.mxu0 0.0
    %1369 = vmatprep.subr.mxu0 0.0
    %1370 = vmatpush1.msra.mxu0 0.0
    %1371 = vmatprep.subr.mxu0 0.0
    %1372 = vmatpush1.msra.mxu0 0.0
    %1373 = vmatprep.subr.mxu0 0.0
    %1374 = vmatpush1.msra.mxu0 0.0
    %1375 = vmatprep.subr.mxu0 0.0
    %1376 = vmatpush1.msra.mxu0 0.0
    %1377 = vmatprep.subr.mxu0 0.0
    %1378 = vmatpush1.msra.mxu0 0.0
    %1379 = vmatprep.subr.mxu0 0.0
    %1380 = vmatpush1.msra.mxu0 0.0
    %1381 = vmatprep.subr.mxu0 0.0
    %1382 = vmatpush1.msra.mxu0 0.0
    %1383 = vmatprep.subr.mxu0 0.0
    %1384 = vmatpush1.msra.mxu0 0.0
    %1385 = vmatprep.subr.mxu0 0.0
    %1386 = vmatpush1.msra.mxu0 0.0
    %1387 = vmatprep.subr.mxu0 0.0
    %1388 = vmatpush1.msra.mxu0 0.0
    %1389 = vmatprep.subr.mxu0 0.0
    %1390 = vmatpush1.msra.mxu0 0.0
    %1391 = vmatprep.subr.mxu0 0.0
    %1392 = vmatpush1.msra.mxu0 0.0
    %1393 = vmatprep.subr.mxu0 0.0
    %1394 = vmatpush1.msra.mxu0 0.0
    %1395 = vmatprep.subr.mxu0 0.0
    %1396 = vmatpush1.msra.mxu0 0.0
    %1397 = vmatprep.subr.mxu0 0.0
    %1398 = vmatpush1.msra.mxu0 0.0
    %1399 = vmatprep.subr.mxu0 0.0
    %1400 = vmatpush1.msra.mxu0 0.0
    %1401 = vmatprep.subr.mxu0 0.0
    %1402 = vmatpush1.msra.mxu0 0.0
    %1403 = vmatprep.mubr.f32.mxu0 0.0
    %1404 = vmatmul.mubr.f32.gmra.mrb[0].mxu0 %v1334
    %v1405 = vpop.f32.mrb[0].mxu0
    %v1406 = vadd.f32 0.0, %v1405
    %v1407 = vpop.f32.mrb[0].mxu0
    %1408 = vmatprep.mubr.f32.mxu0 0.0
    %1409 = vmatmul.mubr.f32.gmra.mrb[0].mxu0 %v1337
    %v1410 = vpop.f32.mrb[0].mxu0
    %v1411 = vadd.f32 0.0, %v1410
    %v1412 = vpop.f32.mrb[0].mxu0
    %1413 = vdwg.mxu0
    %v1414 = vadd.f32 %v989, %v1406
    %v1415 = vadd.f32 %v994, %v1411
    %1416 = vrot.lane.b32.xlu0 %v150, 104
    %v1417 = vpop.permute.xlu0 %1416
    %1418 = vrot.lane.b32.xlu0 %v150, 72
    %v1419 = vpop.permute.xlu0 %1418
    %v1420 = vsel %vm166, %v1417, 0
    %v1422 = vsel %vm166, %v1419, 0
    %1424 = vmatprep.subr.mxu0 0.0
    %1425 = vmatpush1.xpose.msra.mxu0 %v1422
    %1426 = vmatprep.subr.mxu0 0.0
    %1427 = vmatpush1.xpose.msra.mxu0 0.0
    %1428 = vmatprep.subr.mxu0 0.0
    %1429 = vmatpush1.xpose.msra.mxu0 0.0
    %1430 = vmatprep.subr.mxu0 0.0
    %1431 = vmatpush1.xpose.msra.mxu0 0.0
    %1432 = vmatprep.subr.mxu0 0.0
    %1433 = vmatpush1.xpose.msra.mxu0 0.0
    %1434 = vmatprep.subr.mxu0 0.0
    %1435 = vmatpush1.xpose.msra.mxu0 0.0
    %1436 = vmatprep.subr.mxu0 0.0
    %1437 = vmatpush1.xpose.msra.mxu0 0.0
    %1438 = vmatprep.subr.mxu0 0.0
    %1439 = vmatpush1.xpose.msra.mxu0 0.0
    %1440 = vmatprep.subr.mxu0 0.0
    %1441 = vmatpush1.xpose.msra.mxu0 0.0
    %1442 = vmatprep.subr.mxu0 0.0
    %1443 = vmatpush1.xpose.msra.mxu0 0.0
    %1444 = vmatprep.subr.mxu0 0.0
    %1445 = vmatpush1.xpose.msra.mxu0 0.0
    %1446 = vmatprep.subr.mxu0 0.0
    %1447 = vmatpush1.xpose.msra.mxu0 0.0
    %1448 = vmatprep.subr.mxu0 0.0
    %1449 = vmatpush1.xpose.msra.mxu0 0.0
    %1450 = vmatprep.subr.mxu0 0.0
    %1451 = vmatpush1.xpose.msra.mxu0 0.0
    %1452 = vmatprep.subr.mxu0 0.0
    %1453 = vmatpush1.xpose.msra.mxu0 0.0
    %1454 = vmatprep.subr.mxu0 0.0
    %1455 = vmatpush1.xpose.msra.mxu0 0.0
    %1456 = vmatprep.subr.mxu0 0.0
    %1457 = vmatpush1.xpose.msra.mxu0 0.0
    %1458 = vmatprep.subr.mxu0 0.0
    %1459 = vmatpush1.xpose.msra.mxu0 0.0
    %1460 = vmatprep.subr.mxu0 0.0
    %1461 = vmatpush1.xpose.msra.mxu0 0.0
    %1462 = vmatprep.subr.mxu0 0.0
    %1463 = vmatpush1.xpose.msra.mxu0 0.0
    %1464 = vmatprep.subr.mxu0 0.0
    %1465 = vmatpush1.xpose.msra.mxu0 0.0
    %1466 = vmatprep.subr.mxu0 0.0
    %1467 = vmatpush1.xpose.msra.mxu0 0.0
    %1468 = vmatprep.subr.mxu0 0.0
    %1469 = vmatpush1.xpose.msra.mxu0 0.0
    %1470 = vmatprep.subr.mxu0 0.0
    %1471 = vmatpush1.xpose.msra.mxu0 0.0
    %1472 = vmatprep.subr.mxu0 0.0
    %1473 = vmatpush1.xpose.msra.mxu0 0.0
    %1474 = vmatprep.subr.mxu0 0.0
    %1475 = vmatpush1.xpose.msra.mxu0 0.0
    %1476 = vmatprep.subr.mxu0 0.0
    %1477 = vmatpush1.xpose.msra.mxu0 0.0
    %1478 = vmatprep.subr.mxu0 0.0
    %1479 = vmatpush1.xpose.msra.mxu0 0.0
    %1480 = vmatprep.subr.mxu0 0.0
    %1481 = vmatpush1.xpose.msra.mxu0 0.0
    %1482 = vmatprep.subr.mxu0 0.0
    %1483 = vmatpush1.xpose.msra.mxu0 0.0
    %1484 = vmatprep.subr.mxu0 0.0
    %1485 = vmatpush1.xpose.msra.mxu0 0.0
    %1486 = vmatprep.subr.mxu0 0.0
    %1487 = vmatpush1.xpose.msra.mxu0 0.0
    %1488 = vmatprep.mubr.f32.mxu0 0.0
    %1489 = vmatmul.mubr.f32.gmra.mrb[0].mxu0 %v1420
    %v1490 = vpop.f32.mrb[0].mxu0
    %v1491 = vadd.f32 0.0, %v1490
    %v1492 = vpop.f32.mrb[0].mxu0
    %1493 = vdwg.mxu0
    %1494 = vrot.lane.b32.xlu0 %v155, 104
    %v1495 = vpop.permute.xlu0 %1494
    %1496 = vrot.lane.b32.xlu0 %v155, 72
    %v1497 = vpop.permute.xlu0 %1496
    %v1498 = vsel %vm166, %v1495, 0
    %v1500 = vsel %vm166, %v1497, 0
    %1502 = vmatprep.subr.mxu0 0.0
    %1503 = vmatpush1.xpose.msra.mxu0 %v1500
    %1504 = vmatprep.subr.mxu0 0.0
    %1505 = vmatpush1.xpose.msra.mxu0 0.0
    %1506 = vmatprep.subr.mxu0 0.0
    %1507 = vmatpush1.xpose.msra.mxu0 0.0
    %1508 = vmatprep.subr.mxu0 0.0
    %1509 = vmatpush1.xpose.msra.mxu0 0.0
    %1510 = vmatprep.subr.mxu0 0.0
    %1511 = vmatpush1.xpose.msra.mxu0 0.0
    %1512 = vmatprep.subr.mxu0 0.0
    %1513 = vmatpush1.xpose.msra.mxu0 0.0
    %1514 = vmatprep.subr.mxu0 0.0
    %1515 = vmatpush1.xpose.msra.mxu0 0.0
    %1516 = vmatprep.subr.mxu0 0.0
    %1517 = vmatpush1.xpose.msra.mxu0 0.0
    %1518 = vmatprep.subr.mxu0 0.0
    %1519 = vmatpush1.xpose.msra.mxu0 0.0
    %1520 = vmatprep.subr.mxu0 0.0
    %1521 = vmatpush1.xpose.msra.mxu0 0.0
    %1522 = vmatprep.subr.mxu0 0.0
    %1523 = vmatpush1.xpose.msra.mxu0 0.0
    %1524 = vmatprep.subr.mxu0 0.0
    %1525 = vmatpush1.xpose.msra.mxu0 0.0
    %1526 = vmatprep.subr.mxu0 0.0
    %1527 = vmatpush1.xpose.msra.mxu0 0.0
    %1528 = vmatprep.subr.mxu0 0.0
    %1529 = vmatpush1.xpose.msra.mxu0 0.0
    %1530 = vmatprep.subr.mxu0 0.0
    %1531 = vmatpush1.xpose.msra.mxu0 0.0
    %1532 = vmatprep.subr.mxu0 0.0
    %1533 = vmatpush1.xpose.msra.mxu0 0.0
    %1534 = vmatprep.subr.mxu0 0.0
    %1535 = vmatpush1.xpose.msra.mxu0 0.0
    %1536 = vmatprep.subr.mxu0 0.0
    %1537 = vmatpush1.xpose.msra.mxu0 0.0
    %1538 = vmatprep.subr.mxu0 0.0
    %1539 = vmatpush1.xpose.msra.mxu0 0.0
    %1540 = vmatprep.subr.mxu0 0.0
    %1541 = vmatpush1.xpose.msra.mxu0 0.0
    %1542 = vmatprep.subr.mxu0 0.0
    %1543 = vmatpush1.xpose.msra.mxu0 0.0
    %1544 = vmatprep.subr.mxu0 0.0
    %1545 = vmatpush1.xpose.msra.mxu0 0.0
    %1546 = vmatprep.subr.mxu0 0.0
    %1547 = vmatpush1.xpose.msra.mxu0 0.0
    %1548 = vmatprep.subr.mxu0 0.0
    %1549 = vmatpush1.xpose.msra.mxu0 0.0
    %1550 = vmatprep.subr.mxu0 0.0
    %1551 = vmatpush1.xpose.msra.mxu0 0.0
    %1552 = vmatprep.subr.mxu0 0.0
    %1553 = vmatpush1.xpose.msra.mxu0 0.0
    %1554 = vmatprep.subr.mxu0 0.0
    %1555 = vmatpush1.xpose.msra.mxu0 0.0
    %1556 = vmatprep.subr.mxu0 0.0
    %1557 = vmatpush1.xpose.msra.mxu0 0.0
    %1558 = vmatprep.subr.mxu0 0.0
    %1559 = vmatpush1.xpose.msra.mxu0 0.0
    %1560 = vmatprep.subr.mxu0 0.0
    %1561 = vmatpush1.xpose.msra.mxu0 0.0
    %1562 = vmatprep.subr.mxu0 0.0
    %1563 = vmatpush1.xpose.msra.mxu0 0.0
    %1564 = vmatprep.subr.mxu0 0.0
    %1565 = vmatpush1.xpose.msra.mxu0 0.0
    %1566 = vmatprep.mubr.f32.mxu0 0.0
    %1567 = vmatmul.mubr.f32.gmra.mrb[0].mxu0 %v1498
    %v1568 = vpop.f32.mrb[0].mxu0
    %v1569 = vadd.f32 0.0, %v1568
    %v1570 = vpop.f32.mrb[0].mxu0
    %1571 = vdwg.mxu0
    %v1572 = vmul.f32 %v1491, 0.35355338
    %v1573 = vmul.f32 %v1569, 0.35355338
    %v1574 = vsel %vm321, %v1572, -inf
    %v1575 = vsel %vm321, %v1573, -inf
    %v1576 = vsel %vm166, %v1574, -inf
    %1577 = vmax.xlane.f32.xlu0 %v1576
    %v1578 = vpop.xlane.xlu0 %1577
    %v1579 = vsel %vm166, %v1575, -inf
    %1580 = vmax.xlane.f32.xlu0 %v1579
    %v1581 = vpop.xlane.xlu0 %1580
    %v1582 = vsub.f32 %v1574, %v1578
    %v1583 = vsub.f32 %v1575, %v1581
    %v1584 = vmul.f32 %v1582, 1.442695
    %v1585 = vpow.pop %v1584
    %v1586 = vmul.f32 %v1583, 1.442695
    %v1587 = vpow.pop %v1586
    %v1588 = vsel %vm166, %v1585, 0.0
    %1589 = vadd.xlane.f32.xlu0 %v1588
    %v1590 = vpop.xlane.xlu0 %1589
    %v1591 = vsel %vm166, %v1587, 0.0
    %1592 = vadd.xlane.f32.xlu0 %v1591
    %v1593 = vpop.xlane.xlu0 %1592
    %v1594 = vrcp.pop %v1590
    %v1595 = vmul.f32 %v1585, %v1594
    %v1596 = vrcp.pop %v1593
    %v1597 = vmul.f32 %v1587, %v1596
    %1598 = vrot.lane.b32.xlu0 %v150, 40
    %v1599 = vpop.permute.xlu0 %1598
    %v1602 = vsel %vm166, %v1595, 0
    %1604 = vmatprep.subr.mxu0 0.0
    %1605 = vmatpush1.msra.mxu0 %v1599
    %1606 = vmatprep.subr.mxu0 0.0
    %1607 = vmatpush1.msra.mxu0 0.0
    %1608 = vmatprep.subr.mxu0 0.0
    %1609 = vmatpush1.msra.mxu0 0.0
    %1610 = vmatprep.subr.mxu0 0.0
    %1611 = vmatpush1.msra.mxu0 0.0
    %1612 = vmatprep.subr.mxu0 0.0
    %1613 = vmatpush1.msra.mxu0 0.0
    %1614 = vmatprep.subr.mxu0 0.0
    %1615 = vmatpush1.msra.mxu0 0.0
    %1616 = vmatprep.subr.mxu0 0.0
    %1617 = vmatpush1.msra.mxu0 0.0
    %1618 = vmatprep.subr.mxu0 0.0
    %1619 = vmatpush1.msra.mxu0 0.0
    %1620 = vmatprep.subr.mxu0 0.0
    %1621 = vmatpush1.msra.mxu0 0.0
    %1622 = vmatprep.subr.mxu0 0.0
    %1623 = vmatpush1.msra.mxu0 0.0
    %1624 = vmatprep.subr.mxu0 0.0
    %1625 = vmatpush1.msra.mxu0 0.0
    %1626 = vmatprep.subr.mxu0 0.0
    %1627 = vmatpush1.msra.mxu0 0.0
    %1628 = vmatprep.subr.mxu0 0.0
    %1629 = vmatpush1.msra.mxu0 0.0
    %1630 = vmatprep.subr.mxu0 0.0
    %1631 = vmatpush1.msra.mxu0 0.0
    %1632 = vmatprep.subr.mxu0 0.0
    %1633 = vmatpush1.msra.mxu0 0.0
    %1634 = vmatprep.subr.mxu0 0.0
    %1635 = vmatpush1.msra.mxu0 0.0
    %1636 = vmatprep.subr.mxu0 0.0
    %1637 = vmatpush1.msra.mxu0 0.0
    %1638 = vmatprep.subr.mxu0 0.0
    %1639 = vmatpush1.msra.mxu0 0.0
    %1640 = vmatprep.subr.mxu0 0.0
    %1641 = vmatpush1.msra.mxu0 0.0
    %1642 = vmatprep.subr.mxu0 0.0
    %1643 = vmatpush1.msra.mxu0 0.0
    %1644 = vmatprep.subr.mxu0 0.0
    %1645 = vmatpush1.msra.mxu0 0.0
    %1646 = vmatprep.subr.mxu0 0.0
    %1647 = vmatpush1.msra.mxu0 0.0
    %1648 = vmatprep.subr.mxu0 0.0
    %1649 = vmatpush1.msra.mxu0 0.0
    %1650 = vmatprep.subr.mxu0 0.0
    %1651 = vmatpush1.msra.mxu0 0.0
    %1652 = vmatprep.subr.mxu0 0.0
    %1653 = vmatpush1.msra.mxu0 0.0
    %1654 = vmatprep.subr.mxu0 0.0
    %1655 = vmatpush1.msra.mxu0 0.0
    %1656 = vmatprep.subr.mxu0 0.0
    %1657 = vmatpush1.msra.mxu0 0.0
    %1658 = vmatprep.subr.mxu0 0.0
    %1659 = vmatpush1.msra.mxu0 0.0
    %1660 = vmatprep.subr.mxu0 0.0
    %1661 = vmatpush1.msra.mxu0 0.0
    %1662 = vmatprep.subr.mxu0 0.0
    %1663 = vmatpush1.msra.mxu0 0.0
    %1664 = vmatprep.subr.mxu0 0.0
    %1665 = vmatpush1.msra.mxu0 0.0
    %1666 = vmatprep.subr.mxu0 0.0
    %1667 = vmatpush1.msra.mxu0 0.0
    %1668 = vmatprep.mubr.f32.mxu0 0.0
    %1669 = vmatmul.mubr.f32.gmra.mrb[0].mxu0 %v1602
    %v1670 = vpop.f32.mrb[0].mxu0
    %v1671 = vadd.f32 0.0, %v1670
    %v1672 = vpop.f32.mrb[0].mxu0
    %1673 = vdwg.mxu0
    %1674 = vrot.lane.b32.xlu0 %v155, 40
    %v1675 = vpop.permute.xlu0 %1674
    %v1678 = vsel %vm166, %v1597, 0
    %1680 = vmatprep.subr.mxu0 0.0
    %1681 = vmatpush1.msra.mxu0 %v1675
    %1682 = vmatprep.subr.mxu0 0.0
    %1683 = vmatpush1.msra.mxu0 0.0
    %1684 = vmatprep.subr.mxu0 0.0
    %1685 = vmatpush1.msra.mxu0 0.0
    %1686 = vmatprep.subr.mxu0 0.0
    %1687 = vmatpush1.msra.mxu0 0.0
    %1688 = vmatprep.subr.mxu0 0.0
    %1689 = vmatpush1.msra.mxu0 0.0
    %1690 = vmatprep.subr.mxu0 0.0
    %1691 = vmatpush1.msra.mxu0 0.0
    %1692 = vmatprep.subr.mxu0 0.0
    %1693 = vmatpush1.msra.mxu0 0.0
    %1694 = vmatprep.subr.mxu0 0.0
    %1695 = vmatpush1.msra.mxu0 0.0
    %1696 = vmatprep.subr.mxu0 0.0
    %1697 = vmatpush1.msra.mxu0 0.0
    %1698 = vmatprep.subr.mxu0 0.0
    %1699 = vmatpush1.msra.mxu0 0.0
    %1700 = vmatprep.subr.mxu0 0.0
    %1701 = vmatpush1.msra.mxu0 0.0
    %1702 = vmatprep.subr.mxu0 0.0
    %1703 = vmatpush1.msra.mxu0 0.0
    %1704 = vmatprep.subr.mxu0 0.0
    %1705 = vmatpush1.msra.mxu0 0.0
    %1706 = vmatprep.subr.mxu0 0.0
    %1707 = vmatpush1.msra.mxu0 0.0
    %1708 = vmatprep.subr.mxu0 0.0
    %1709 = vmatpush1.msra.mxu0 0.0
    %1710 = vmatprep.subr.mxu0 0.0
    %1711 = vmatpush1.msra.mxu0 0.0
    %1712 = vmatprep.subr.mxu0 0.0
    %1713 = vmatpush1.msra.mxu0 0.0
    %1714 = vmatprep.subr.mxu0 0.0
    %1715 = vmatpush1.msra.mxu0 0.0
    %1716 = vmatprep.subr.mxu0 0.0
    %1717 = vmatpush1.msra.mxu0 0.0
    %1718 = vmatprep.subr.mxu0 0.0
    %1719 = vmatpush1.msra.mxu0 0.0
    %1720 = vmatprep.subr.mxu0 0.0
    %1721 = vmatpush1.msra.mxu0 0.0
    %1722 = vmatprep.subr.mxu0 0.0
    %1723 = vmatpush1.msra.mxu0 0.0
    %1724 = vmatprep.subr.mxu0 0.0
    %1725 = vmatpush1.msra.mxu0 0.0
    %1726 = vmatprep.subr.mxu0 0.0
    %1727 = vmatpush1.msra.mxu0 0.0
    %1728 = vmatprep.subr.mxu0 0.0
    %1729 = vmatpush1.msra.mxu0 0.0
    %1730 = vmatprep.subr.mxu0 0.0
    %1731 = vmatpush1.msra.mxu0 0.0
    %1732 = vmatprep.subr.mxu0 0.0
    %1733 = vmatpush1.msra.mxu0 0.0
    %1734 = vmatprep.subr.mxu0 0.0
    %1735 = vmatpush1.msra.mxu0 0.0
    %1736 = vmatprep.subr.mxu0 0.0
    %1737 = vmatpush1.msra.mxu0 0.0
    %1738 = vmatprep.subr.mxu0 0.0
    %1739 = vmatpush1.msra.mxu0 0.0
    %1740 = vmatprep.subr.mxu0 0.0
    %1741 = vmatpush1.msra.mxu0 0.0
    %1742 = vmatprep.subr.mxu0 0.0
    %1743 = vmatpush1.msra.mxu0 0.0
    %1744 = vmatprep.mubr.f32.mxu0 0.0
    %1745 = vmatmul.mubr.f32.gmra.mrb[0].mxu0 %v1678
    %v1746 = vpop.f32.mrb[0].mxu0
    %v1747 = vadd.f32 0.0, %v1746
    %v1748 = vpop.f32.mrb[0].mxu0
    %1749 = vdwg.mxu0
    %s1750 = scalar_lea.vmem %s3, 24
    %v1751 = vld [vmem:[%s1750] sm:$0xff]
    %v1753 = vsel %vm166, %v1671, 0
    %v1756 = vsel %vm166, %v1747, 0
    %1758 = vmatprep.subr.mxu0 0.0
    %1759 = vmatpush1.msra.mxu0 %v1751
    %1760 = vmatprep.subr.mxu0 0.0
    %1761 = vmatpush1.msra.mxu0 0.0
    %1762 = vmatprep.subr.mxu0 0.0
    %1763 = vmatpush1.msra.mxu0 0.0
    %1764 = vmatprep.subr.mxu0 0.0
    %1765 = vmatpush1.msra.mxu0 0.0
    %1766 = vmatprep.subr.mxu0 0.0
    %1767 = vmatpush1.msra.mxu0 0.0
    %1768 = vmatprep.subr.mxu0 0.0
    %1769 = vmatpush1.msra.mxu0 0.0
    %1770 = vmatprep.subr.mxu0 0.0
    %1771 = vmatpush1.msra.mxu0 0.0
    %1772 = vmatprep.subr.mxu0 0.0
    %1773 = vmatpush1.msra.mxu0 0.0
    %1774 = vmatprep.subr.mxu0 0.0
    %1775 = vmatpush1.msra.mxu0 0.0
    %1776 = vmatprep.subr.mxu0 0.0
    %1777 = vmatpush1.msra.mxu0 0.0
    %1778 = vmatprep.subr.mxu0 0.0
    %1779 = vmatpush1.msra.mxu0 0.0
    %1780 = vmatprep.subr.mxu0 0.0
    %1781 = vmatpush1.msra.mxu0 0.0
    %1782 = vmatprep.subr.mxu0 0.0
    %1783 = vmatpush1.msra.mxu0 0.0
    %1784 = vmatprep.subr.mxu0 0.0
    %1785 = vmatpush1.msra.mxu0 0.0
    %1786 = vmatprep.subr.mxu0 0.0
    %1787 = vmatpush1.msra.mxu0 0.0
    %1788 = vmatprep.subr.mxu0 0.0
    %1789 = vmatpush1.msra.mxu0 0.0
    %1790 = vmatprep.subr.mxu0 0.0
    %1791 = vmatpush1.msra.mxu0 0.0
    %1792 = vmatprep.subr.mxu0 0.0
    %1793 = vmatpush1.msra.mxu0 0.0
    %1794 = vmatprep.subr.mxu0 0.0
    %1795 = vmatpush1.msra.mxu0 0.0
    %1796 = vmatprep.subr.mxu0 0.0
    %1797 = vmatpush1.msra.mxu0 0.0
    %1798 = vmatprep.subr.mxu0 0.0
    %1799 = vmatpush1.msra.mxu0 0.0
    %1800 = vmatprep.subr.mxu0 0.0
    %1801 = vmatpush1.msra.mxu0 0.0
    %1802 = vmatprep.subr.mxu0 0.0
    %1803 = vmatpush1.msra.mxu0 0.0
    %1804 = vmatprep.subr.mxu0 0.0
    %1805 = vmatpush1.msra.mxu0 0.0
    %1806 = vmatprep.subr.mxu0 0.0
    %1807 = vmatpush1.msra.mxu0 0.0
    %1808 = vmatprep.subr.mxu0 0.0
    %1809 = vmatpush1.msra.mxu0 0.0
    %1810 = vmatprep.subr.mxu0 0.0
    %1811 = vmatpush1.msra.mxu0 0.0
    %1812 = vmatprep.subr.mxu0 0.0
    %1813 = vmatpush1.msra.mxu0 0.0
    %1814 = vmatprep.subr.mxu0 0.0
    %1815 = vmatpush1.msra.mxu0 0.0
    %1816 = vmatprep.subr.mxu0 0.0
    %1817 = vmatpush1.msra.mxu0 0.0
    %1818 = vmatprep.subr.mxu0 0.0
    %1819 = vmatpush1.msra.mxu0 0.0
    %1820 = vmatprep.subr.mxu0 0.0
    %1821 = vmatpush1.msra.mxu0 0.0
    %1822 = vmatprep.mubr.f32.mxu0 0.0
    %1823 = vmatmul.mubr.f32.gmra.mrb[0].mxu0 %v1753
    %v1824 = vpop.f32.mrb[0].mxu0
    %v1825 = vadd.f32 0.0, %v1824
    %v1826 = vpop.f32.mrb[0].mxu0
    %1827 = vmatprep.mubr.f32.mxu0 0.0
    %1828 = vmatmul.mubr.f32.gmra.mrb[0].mxu0 %v1756
    %v1829 = vpop.f32.mrb[0].mxu0
    %v1830 = vadd.f32 0.0, %v1829
    %v1831 = vpop.f32.mrb[0].mxu0
    %1832 = vdwg.mxu0
    %v1833 = vadd.f32 %v1414, %v1825
    %v1834 = vadd.f32 %v1415, %v1830
    %1835 = vst.msk [vmem:[#allocation4] sm:$0xff] %vm166, %v343
    %1836 = vst.msk [vmem:[#allocation4 + $0x8] sm:$0xff] %vm166, %v678
    %1837 = vst.msk [vmem:[#allocation4 + $0x10] sm:$0xff] %vm166, %v1176
    %1838 = vst.msk [vmem:[#allocation4 + $0x18] sm:$0xff] %vm166, %v1595
    %1839 = vst.msk [vmem:[#allocation4 + $0x20] sm:$0xff] %vm166, %v345
    %1840 = vst.msk [vmem:[#allocation4 + $0x28] sm:$0xff] %vm166, %v680
    %1841 = vst.msk [vmem:[#allocation4 + $0x30] sm:$0xff] %vm166, %v1178
    %1842 = vst.msk [vmem:[#allocation4 + $0x38] sm:$0xff] %vm166, %v1597
    %v1843 = vadd.f32 %v36, %v1833
    %v1844 = vadd.f32 %v37, %v1834
    %v1845 = vld [vmem:[%s4] sm:$0x1]
    %v1847 = vlaneseq
    %v1848 = vshrl.u32 %v1847, 7
    %v1849 = vsub.s32 0, %v1848
    %v1850 = vrot.slane %v1845, %v1849
    %v1852 = vadd.f32 %v1843, %v1850
    %v1853 = vadd.f32 %v1844, %v1850
    %v1854 = vsel %vm38, %v1852, 0.0
    %1855 = vadd.xlane.f32.xlu0 %v1854
    %v1856 = vpop.xlane.xlu0 %1855
    %v1857 = vsel %vm38, %v1853, 0.0
    %1858 = vadd.xlane.f32.xlu0 %v1857
    %v1859 = vpop.xlane.xlu0 %1858
    %v1860 = vmul.f32 %v1856, %v45
    %v1861 = vmul.f32 %v1859, %v45
    %v1862 = vsub.f32 %v1852, %v1860
    %v1863 = vsub.f32 %v1853, %v1861
    %v1864 = vmul.f32 %v1862, %v1862
    %v1865 = vmul.f32 %v1863, %v1863
    %v1866 = vsel %vm38, %v1864, 0.0
    %1867 = vadd.xlane.f32.xlu0 %v1866
    %v1868 = vpop.xlane.xlu0 %1867
    %v1869 = vsel %vm38, %v1865, 0.0
    %1870 = vadd.xlane.f32.xlu0 %v1869
    %v1871 = vpop.xlane.xlu0 %1870
    %v1872 = vmul.f32 %v1868, %v45
    %v1873 = vmul.f32 %v1871, %v45
    %v1874 = vadd.f32 %v1872, 1e-05
    %v1875 = vadd.f32 %v1873, 1e-05
    %v1876 = vrsqrt.pop %v1874
    %v1877 = vrsqrt.pop %v1875
    %v1878 = vmul.f32 %v1862, %v1876
    %v1879 = vmul.f32 %v1863, %v1877
    %v1880 = vld [vmem:[%s5] sm:$0xff]
    %v1881 = vld [vmem:[%s5 + $0x8] sm:$0xff]
    %v1882 = vld [vmem:[%s5 + $0x10] sm:$0xff]
    %v1883 = vld [vmem:[%s5 + $0x18] sm:$0xff]
    %v1884 = vld [vmem:[%s6] sm:$0x1]
    %v1886 = vlaneseq
    %v1887 = vshrl.u32 %v1886, 7
    %v1888 = vsub.s32 0, %v1887
    %v1889 = vrot.slane %v1884, %v1888
    %v1892 = vsel %vm38, %v1878, 0
    %v1895 = vsel %vm38, %v1879, 0
    %1897 = vmatprep.subr.mxu0 0.0
    %1898 = vmatpush1.msra.mxu0 %v1880
    %1899 = vmatprep.subr.mxu0 0.0
    %1900 = vmatpush1.msra.mxu0 %v1881
    %1901 = vmatprep.subr.mxu0 0.0
    %1902 = vmatpush1.msra.mxu0 %v1882
    %1903 = vmatprep.subr.mxu0 0.0
    %1904 = vmatpush1.msra.mxu0 %v1883
    %1905 = vmatprep.subr.mxu0 0.0
    %1906 = vmatpush1.msra.mxu0 0.0
    %1907 = vmatprep.subr.mxu0 0.0
    %1908 = vmatpush1.msra.mxu0 0.0
    %1909 = vmatprep.subr.mxu0 0.0
    %1910 = vmatpush1.msra.mxu0 0.0
    %1911 = vmatprep.subr.mxu0 0.0
    %1912 = vmatpush1.msra.mxu0 0.0
    %1913 = vmatprep.subr.mxu0 0.0
    %1914 = vmatpush1.msra.mxu0 0.0
    %1915 = vmatprep.subr.mxu0 0.0
    %1916 = vmatpush1.msra.mxu0 0.0
    %1917 = vmatprep.subr.mxu0 0.0
    %1918 = vmatpush1.msra.mxu0 0.0
    %1919 = vmatprep.subr.mxu0 0.0
    %1920 = vmatpush1.msra.mxu0 0.0
    %1921 = vmatprep.subr.mxu0 0.0
    %1922 = vmatpush1.msra.mxu0 0.0
    %1923 = vmatprep.subr.mxu0 0.0
    %1924 = vmatpush1.msra.mxu0 0.0
    %1925 = vmatprep.subr.mxu0 0.0
    %1926 = vmatpush1.msra.mxu0 0.0
    %1927 = vmatprep.subr.mxu0 0.0
    %1928 = vmatpush1.msra.mxu0 0.0
    %1929 = vmatprep.subr.mxu0 0.0
    %1930 = vmatpush1.msra.mxu0 0.0
    %1931 = vmatprep.subr.mxu0 0.0
    %1932 = vmatpush1.msra.mxu0 0.0
    %1933 = vmatprep.subr.mxu0 0.0
    %1934 = vmatpush1.msra.mxu0 0.0
    %1935 = vmatprep.subr.mxu0 0.0
    %1936 = vmatpush1.msra.mxu0 0.0
    %1937 = vmatprep.subr.mxu0 0.0
    %1938 = vmatpush1.msra.mxu0 0.0
    %1939 = vmatprep.subr.mxu0 0.0
    %1940 = vmatpush1.msra.mxu0 0.0
    %1941 = vmatprep.subr.mxu0 0.0
    %1942 = vmatpush1.msra.mxu0 0.0
    %1943 = vmatprep.subr.mxu0 0.0
    %1944 = vmatpush1.msra.mxu0 0.0
    %1945 = vmatprep.subr.mxu0 0.0
    %1946 = vmatpush1.msra.mxu0 0.0
    %1947 = vmatprep.subr.mxu0 0.0
    %1948 = vmatpush1.msra.mxu0 0.0
    %1949 = vmatprep.subr.mxu0 0.0
    %1950 = vmatpush1.msra.mxu0 0.0
    %1951 = vmatprep.subr.mxu0 0.0
    %1952 = vmatpush1.msra.mxu0 0.0
    %1953 = vmatprep.subr.mxu0 0.0
    %1954 = vmatpush1.msra.mxu0 0.0
    %1955 = vmatprep.subr.mxu0 0.0
    %1956 = vmatpush1.msra.mxu0 0.0
    %1957 = vmatprep.subr.mxu0 0.0
    %1958 = vmatpush1.msra.mxu0 0.0
    %1959 = vmatprep.subr.mxu0 0.0
    %1960 = vmatpush1.msra.mxu0 0.0
    %1961 = vmatprep.mubr.f32.mxu0 0.0
    %1962 = vmatmul.mubr.f32.gmra.mrb[0].mxu0 %v1892
    %v1963 = vpop.f32.mrb[0].mxu0
    %v1964 = vadd.f32 %v1889, %v1963
    %v1965 = vpop.f32.mrb[0].mxu0
    %1966 = vmatprep.mubr.f32.mxu0 0.0
    %1967 = vmatmul.mubr.f32.gmra.mrb[0].mxu0 %v1895
    %v1968 = vpop.f32.mrb[0].mxu0
    %v1969 = vadd.f32 %v1889, %v1968
    %v1970 = vpop.f32.mrb[0].mxu0
    %1971 = vdwg.mxu0
    %v1972 = vmul.f32 %v1964, 0.5
    %v1973 = vmul.f32 %v1969, 0.5
    %v1974 = vmul.f32 %v1964, 0.70710677
    %v1975 = vmul.f32 %v1969, 0.70710677
    %v1976 = verf.f32.pop %v1974
    %v1977 = verf.f32.pop %v1975
    %v1978 = vadd.f32 %v1976, 1.0
    %v1979 = vadd.f32 %v1977, 1.0
    %v1980 = vmul.f32 %v1972, %v1978
    %v1981 = vmul.f32 %v1973, %v1979
    %v1982 = vld [vmem:[%s7] sm:$0xff]
    %v1983 = vld [vmem:[%s7 + $0x8] sm:$0xff]
    %v1984 = vld [vmem:[%s7 + $0x10] sm:$0xff]
    %v1985 = vld [vmem:[%s7 + $0x18] sm:$0xff]
    %v1986 = vld [vmem:[%s7 + $0x20] sm:$0xff]
    %v1987 = vld [vmem:[%s7 + $0x28] sm:$0xff]
    %v1988 = vld [vmem:[%s7 + $0x30] sm:$0xff]
    %v1989 = vld [vmem:[%s7 + $0x38] sm:$0xff]
    %v1990 = vld [vmem:[%s7 + $0x40] sm:$0xff]
    %v1991 = vld [vmem:[%s7 + $0x48] sm:$0xff]
    %v1992 = vld [vmem:[%s7 + $0x50] sm:$0xff]
    %v1993 = vld [vmem:[%s7 + $0x58] sm:$0xff]
    %v1994 = vld [vmem:[%s7 + $0x60] sm:$0xff]
    %v1995 = vld [vmem:[%s7 + $0x68] sm:$0xff]
    %v1996 = vld [vmem:[%s7 + $0x70] sm:$0xff]
    %v1997 = vld [vmem:[%s7 + $0x78] sm:$0xff]
    %v1998 = vld [vmem:[%s8] sm:$0x1]
    %v2000 = vlaneseq
    %v2001 = vshrl.u32 %v2000, 7
    %v2002 = vsub.s32 0, %v2001
    %v2003 = vrot.slane %v1998, %v2002
    %2005 = vmatprep.subr.mxu0 0.0
    %2006 = vmatpush1.msra.mxu0 %v1982
    %2007 = vmatprep.subr.mxu0 0.0
    %2008 = vmatpush1.msra.mxu0 %v1983
    %2009 = vmatprep.subr.mxu0 0.0
    %2010 = vmatpush1.msra.mxu0 %v1984
    %2011 = vmatprep.subr.mxu0 0.0
    %2012 = vmatpush1.msra.mxu0 %v1985
    %2013 = vmatprep.subr.mxu0 0.0
    %2014 = vmatpush1.msra.mxu0 %v1986
    %2015 = vmatprep.subr.mxu0 0.0
    %2016 = vmatpush1.msra.mxu0 %v1987
    %2017 = vmatprep.subr.mxu0 0.0
    %2018 = vmatpush1.msra.mxu0 %v1988
    %2019 = vmatprep.subr.mxu0 0.0
    %2020 = vmatpush1.msra.mxu0 %v1989
    %2021 = vmatprep.subr.mxu0 0.0
    %2022 = vmatpush1.msra.mxu0 %v1990
    %2023 = vmatprep.subr.mxu0 0.0
    %2024 = vmatpush1.msra.mxu0 %v1991
    %2025 = vmatprep.subr.mxu0 0.0
    %2026 = vmatpush1.msra.mxu0 %v1992
    %2027 = vmatprep.subr.mxu0 0.0
    %2028 = vmatpush1.msra.mxu0 %v1993
    %2029 = vmatprep.subr.mxu0 0.0
    %2030 = vmatpush1.msra.mxu0 %v1994
    %2031 = vmatprep.subr.mxu0 0.0
    %2032 = vmatpush1.msra.mxu0 %v1995
    %2033 = vmatprep.subr.mxu0 0.0
    %2034 = vmatpush1.msra.mxu0 %v1996
    %2035 = vmatprep.subr.mxu0 0.0
    %2036 = vmatpush1.msra.mxu0 %v1997
    %2037 = vmatprep.subr.mxu0 0.0
    %2038 = vmatpush1.msra.mxu0 0.0
    %2039 = vmatprep.subr.mxu0 0.0
    %2040 = vmatpush1.msra.mxu0 0.0
    %2041 = vmatprep.subr.mxu0 0.0
    %2042 = vmatpush1.msra.mxu0 0.0
    %2043 = vmatprep.subr.mxu0 0.0
    %2044 = vmatpush1.msra.mxu0 0.0
    %2045 = vmatprep.subr.mxu0 0.0
    %2046 = vmatpush1.msra.mxu0 0.0
    %2047 = vmatprep.subr.mxu0 0.0
    %2048 = vmatpush1.msra.mxu0 0.0
    %2049 = vmatprep.subr.mxu0 0.0
    %2050 = vmatpush1.msra.mxu0 0.0
    %2051 = vmatprep.subr.mxu0 0.0
    %2052 = vmatpush1.msra.mxu0 0.0
    %2053 = vmatprep.subr.mxu0 0.0
    %2054 = vmatpush1.msra.mxu0 0.0
    %2055 = vmatprep.subr.mxu0 0.0
    %2056 = vmatpush1.msra.mxu0 0.0
    %2057 = vmatprep.subr.mxu0 0.0
    %2058 = vmatpush1.msra.mxu0 0.0
    %2059 = vmatprep.subr.mxu0 0.0
    %2060 = vmatpush1.msra.mxu0 0.0
    %2061 = vmatprep.subr.mxu0 0.0
    %2062 = vmatpush1.msra.mxu0 0.0
    %2063 = vmatprep.subr.mxu0 0.0
    %2064 = vmatpush1.msra.mxu0 0.0
    %2065 = vmatprep.subr.mxu0 0.0
    %2066 = vmatpush1.msra.mxu0 0.0
    %2067 = vmatprep.subr.mxu0 0.0
    %2068 = vmatpush1.msra.mxu0 0.0
    %2069 = vmatprep.mubr.f32.mxu0 0.0
    %2070 = vmatmul.mubr.f32.gmra.mrb[0].mxu0 %v1980
    %v2071 = vpop.f32.mrb[0].mxu0
    %v2072 = vadd.f32 %v2003, %v2071
    %v2073 = vpop.f32.mrb[0].mxu0
    %2074 = vmatprep.mubr.f32.mxu0 0.0
    %2075 = vmatmul.mubr.f32.gmra.mrb[0].mxu0 %v1981
    %v2076 = vpop.f32.mrb[0].mxu0
    %v2077 = vadd.f32 %v2003, %v2076
    %v2078 = vpop.f32.mrb[0].mxu0
    %2079 = vdwg.mxu0
    %v2080 = vadd.f32 %v1852, %v2072
    %v2081 = vadd.f32 %v1853, %v2077
    %2082 = vst.msk [vmem:[#allocation2] sm:$0xff] %vm38, %v2080
    %2083 = vst.msk [vmem:[#allocation2 + $0x8] sm:$0xff] %vm38, %v2081
    // Predicated region
    $region38: #{transformer_block.1} parent=1 // pred_check
      _
    $region39: #{transformer_block.1} parent=1 // pred_check_branch
      %2085 = sbr.rel (0) target = $region41
    $region40: #{transformer_block.1} parent=1 // pred_region
      %s2087 = ssub.s32 256, 256
      %2088 = vsyncadd [#allocation3], %s2087
      %s2089 = sshll.u32 [#allocation2], 4
      %s2090 = int_to_ptr.vmem [resolvable:$true] %s2089
      %2095 = dma.vmem_to_hbm [thread:$0]  %s2090, 256, %s9, [#allocation3], 128, 128, 8
    $region41: #{transformer_block.1} parent=1 // pred_fallthru
      _
    // Predicated region
    $region42: #{transformer_block.1} parent=1 // pred_check
      _
    $region43: #{transformer_block.1} parent=1 // pred_check_branch
      %2097 = sbr.rel (0) target = $region45
    $region44: #{transformer_block.1} parent=1 // pred_region
      %s2099 = ssub.s32 1024, 1024
      %2100 = vsyncadd [#allocation5], %s2099
      %s2101 = sshll.u32 [#allocation4], 4
      %s2102 = int_to_ptr.vmem [resolvable:$true] %s2101
      %2107 = dma.vmem_to_hbm [thread:$0]  %s2102, 1024, %s10, [#allocation5], 128, 128, 8
    $region45: #{transformer_block.1} parent=1 // pred_fallthru
      _
    // Predicated region
    $region46: #{transformer_block.1} parent=1 // pred_check
      _
    $region47: #{transformer_block.1} parent=1 // pred_check_branch
      %2109 = sbr.rel (0) target = $region49
    $region48: #{transformer_block.1} parent=1 // pred_region
      %2110 = dma.done [#allocation3], 256
    $region49: #{transformer_block.1} parent=1 // pred_fallthru
      _
    // Predicated region
    $region50: #{transformer_block.1} parent=1 // pred_check
      _
    $region51: #{transformer_block.1} parent=1 // pred_check_branch
      %2112 = sbr.rel (0) target = $region53
    $region52: #{transformer_block.1} parent=1 // pred_region
      %2113 = dma.done [#allocation5], 1024
    $region53: #{transformer_block.1} parent=1 // pred_fallthru
      _
    %2114 = vsyncpa [#allocation3], 1
    %2115 = vsyncpa [#allocation5], 1

</llo_original>
